<compile_context>
chip_gen: v7x
topology: tpu7x:2x2x1
jax: 0.10.0
libtpu: 0.0.40
codegen_flags: <defaults>
</compile_context>

<pallas_src>
import functools

import jax
import jax.numpy as jnp
from jax.experimental import pallas as pl
from jax.experimental.pallas import tpu as pltpu


# ----------------------------------------------------------------------------
# helpers
# ----------------------------------------------------------------------------
def _round_up(x, m):
    return ((x + m - 1) // m) * m


def _num_tensorcores():
    """Trace-time TensorCore count (v5e/v6e: 1, v7x: 2); conservative fallback 1."""
    try:
        info = pltpu.get_tpu_info()
        for attr in ("num_cores", "core_count", "num_tensorcores",
                     "tensorcore_count"):
            v = getattr(info, attr, None)
            if v:
                return int(v)
    except Exception:
        pass
    try:
        dev = jax.devices()[0]
        v = getattr(dev, "num_cores", None)
        if v:
            return int(v)
        if "v7" in str(getattr(dev, "device_kind", "")).lower():
            return 2
    except Exception:
        pass
    return 1


def _vmem_capacity_bytes():
    try:
        v = getattr(pltpu.get_tpu_info(), "vmem_capacity_bytes", None)
        if v:
            return int(v)
    except Exception:
        pass
    return 64 << 20  # v7x per-TC VMEM (most restrictive across generations)


def _pick_row_tile(n, num_cores, tm_max=512):
    """Generation-aware row tile.

    * 1-TC chips (v5e/v6e): largest tile up to tm_max; one grid step is fine.
    * multi-TC chips (v7x): aim for >= 2 grid steps PER CORE so each core can
      double-buffer its row-tile DMA while the other half of the grid runs."""
    n = max(n, 1)
    tm = min(tm_max, _round_up(n, 8))
    if num_cores > 1:
        target_steps = 2 * num_cores
        if n > 8 * target_steps:
            tm = min(tm, max(8, _round_up(pl.cdiv(n, target_steps), 8)))
    return tm


def _pack_bf16(w, rows, cols):
    """Cast to bf16 and zero-pad to (rows, cols)."""
    w = w.astype(jnp.bfloat16)
    r, c = w.shape
    if r == rows and c == cols:
        return w
    out = jnp.zeros((rows, cols), jnp.bfloat16)
    return out.at[:r, :c].set(w)


# ----------------------------------------------------------------------------
# Pallas kernel: the whole EIGN network for one row tile
# ----------------------------------------------------------------------------
def _eign_fused_kernel(*refs, num_blocks, use_signed, use_unsigned):
    it = iter(refs)
    xs_ref = next(it) if use_signed else None
    xu_ref = next(it) if use_unsigned else None
    ws_refs = [next(it) for _ in range(num_blocks)] if use_signed else []
    wu_refs = [next(it) for _ in range(num_blocks)] if use_unsigned else []
    wh_ref = next(it)          # fused (stacked) head weight
    o_ref = next(it)

    # TODO(synk): if num_blocks grows beyond a few, switch the static unroll to
    # lax.fori_loop over stacked weights to cap vreg live ranges.
    parts = []
    if use_signed:
        xs = xs_ref[...]                                   # bf16 row tile
        for b in range(num_blocks):                        # static unroll
            h = jnp.dot(xs, ws_refs[b][...],
                        preferred_element_type=jnp.float32)
            xs = jnp.tanh(h).astype(jnp.bfloat16)          # f32 tanh -> bf16
        parts.append(xs)
    if use_unsigned:
        xu = xu_ref[...]
        for b in range(num_blocks):
            h = jnp.dot(xu, wu_refs[b][...],
                        preferred_element_type=jnp.float32)
            xu = jnp.maximum(h, 0.0).astype(jnp.bfloat16)  # f32 relu -> bf16
        parts.append(xu)

    x_cat = parts[0] if len(parts) == 1 else jnp.concatenate(parts, axis=-1)
    o_ref[...] = jnp.dot(x_cat, wh_ref[...],
                         preferred_element_type=jnp.float32).astype(o_ref.dtype)


# ----------------------------------------------------------------------------
# EIGN forward (thin JAX wrapper around the single fused Pallas call)
# ----------------------------------------------------------------------------
def eign_forward(params, x_signed, x_unsigned, edge_index, is_directed, *,
                 tm_max=512):
    """Mirrors EIGN.forward (eval mode: dropout = identity)."""
    del edge_index, is_directed  # consumed by the abstract block (see TODO above)

    head_s = params["signed_head"]
    head_u = params["unsigned_head"]
    use_s = head_s is not None
    use_u = head_u is not None
    if use_s and x_signed is None:
        raise ValueError("signed head is configured but x_signed is None")
    if use_u and x_unsigned is None:
        raise ValueError("unsigned head is configured but x_unsigned is None")
    if not use_s and not use_u:
        return None, None

    num_blocks = len(params["blocks"])
    N = x_signed.shape[0] if use_s else x_unsigned.shape[0]

    hid_s = params["blocks"][0]["w_signed"].shape[1] if use_s else 0
    hid_u = params["blocks"][0]["w_unsigned"].shape[1] if use_u else 0
    hid_s_pad = _round_up(hid_s, 128) if use_s else 0
    hid_u_pad = _round_up(hid_u, 128) if use_u else 0
    out_s = head_s.shape[1] if use_s else 0
    out_u = head_u.shape[1] if use_u else 0
    c_out_pad = _round_up(out_s + out_u, 128)   # lane-dense combined output

    # VMEM discipline: shrink row tile when activations get very wide.
    widest = max(hid_s_pad, hid_u_pad, c_out_pad, hid_s_pad + hid_u_pad)
    if widest >= 1024:
        tm_max = min(tm_max, 256)

    num_cores = _num_tensorcores()
    tm = _pick_row_tile(N, num_cores, tm_max)
    grid = (pl.cdiv(N, tm),)

    inputs, in_specs = [], []
    flops = 0
    transcendentals = 0

    def row_spec(c):
        return pl.BlockSpec((tm, c), lambda i: (i, 0))

    def resident_spec(shape):
        return pl.BlockSpec(shape, lambda i: (0, 0))

    # --- inputs: bf16 row tiles, NO wrapper-side padding (partial last tile) --
    if use_s:
        xs = x_signed.astype(jnp.bfloat16)
        inputs.append(xs)
        in_specs.append(row_spec(xs.shape[1]))
    if use_u:
        xu = x_unsigned.astype(jnp.bfloat16)
        inputs.append(xu)
        in_specs.append(row_spec(xu.shape[1]))

    # --- VMEM-resident block weights (bf16, 128-padded hidden dims) ----------
    if use_s:
        cs_in = x_signed.shape[1]
        for b, blk in enumerate(params["blocks"]):
            rows = cs_in if b == 0 else hid_s_pad
            w = _pack_bf16(blk["w_signed"], rows, hid_s_pad)
            inputs.append(w)
            in_specs.append(resident_spec(w.shape))
            flops += 2 * N * rows * hid_s_pad
            transcendentals += N * hid_s_pad                # tanh
    if use_u:
        cu_in = x_unsigned.shape[1]
        for b, blk in enumerate(params["blocks"]):
            rows = cu_in if b == 0 else hid_u_pad
            w = _pack_bf16(blk["w_unsigned"], rows, hid_u_pad)
            inputs.append(w)
            in_specs.append(resident_spec(w.shape))
            flops += 2 * N * rows * hid_u_pad

    # --- fused head: one stacked (hid_s_pad + hid_u_pad, c_out_pad) weight ---
    wh = jnp.zeros((hid_s_pad + hid_u_pad, c_out_pad), jnp.bfloat16)
    if use_s:
        wh = wh.at[:hid_s, :out_s].set(head_s.astype(jnp.bfloat16))
    if use_u:
        wh = wh.at[hid_s_pad:hid_s_pad + hid_u,
                   out_s:out_s + out_u].set(head_u.astype(jnp.bfloat16))
    inputs.append(wh)
    in_specs.append(resident_spec(wh.shape))
    flops += 2 * N * wh.shape[0] * c_out_pad

    # --- VMEM budget: resident weights (double-buffered by default) + tiles --
    weight_bytes = sum(int(a.size) * a.dtype.itemsize
                       for a in inputs if a.ndim == 2 and a.shape[0] != N)
    in_tile_bytes = tm * ((x_signed.shape[1] if use_s else 0)
                          + (x_unsigned.shape[1] if use_u else 0)) * 2
    out_tile_bytes = tm * c_out_pad * 4
    need = 2 * weight_bytes + 2 * in_tile_bytes + 2 * out_tile_bytes + (4 << 20)
    vmem_limit = int(min(max(need, 32 << 20), int(0.9 * _vmem_capacity_bytes())))

    bytes_accessed = sum(int(a.size) * a.dtype.itemsize for a in inputs)
    bytes_accessed += N * c_out_pad * 4

    out = pl.pallas_call(
        functools.partial(_eign_fused_kernel,
                          num_blocks=num_blocks,
                          use_signed=use_s,
                          use_unsigned=use_u),
        out_shape=jax.ShapeDtypeStruct((N, c_out_pad), jnp.float32),
        grid_spec=pltpu.PrefetchScalarGridSpec(
            num_scalar_prefetch=0,
            grid=grid,
            in_specs=in_specs,
            out_specs=pl.BlockSpec((tm, c_out_pad), lambda i: (i, 0)),
        ),
        compiler_params=pltpu.CompilerParams(
            dimension_semantics=("parallel",),
            vmem_limit_bytes=vmem_limit),
        cost_estimate=pl.CostEstimate(
            flops=int(flops),
            transcendentals=int(transcendentals),
            bytes_accessed=int(bytes_accessed)),
    )(*inputs)

    out_signed = out[:, :out_s] if use_s else None
    out_unsigned = out[:, out_s:out_s + out_u] if use_u else None
    return out_signed, out_unsigned


# ----------------------------------------------------------------------------
# Parameter init (weights stored as (in, out))
# ----------------------------------------------------------------------------
def init_eign_params(key,
                     in_channels_signed, hidden_channels_signed, out_channels_signed,
                     in_channels_unsigned, hidden_channels_unsigned, out_channels_unsigned,
                     num_blocks):
    params = {"blocks": [], "signed_head": None, "unsigned_head": None}
    cs, cu = in_channels_signed, in_channels_unsigned
    for _ in range(num_blocks):
        key, ks, ku = jax.random.split(key, 3)
        ws = jax.random.normal(ks, (cs, hidden_channels_signed), jnp.float32)
        ws = ws * (1.0 / jnp.sqrt(cs))
        wu = jax.random.normal(ku, (cu, hidden_channels_unsigned), jnp.float32)
        wu = wu * (1.0 / jnp.sqrt(cu))
        params["blocks"].append({"w_signed": ws, "w_unsigned": wu})
        cs, cu = hidden_channels_signed, hidden_channels_unsigned
    if out_channels_signed:
        key, kh = jax.random.split(key)
        params["signed_head"] = jax.random.normal(
            kh, (hidden_channels_signed, out_channels_signed), jnp.float32
        ) * (1.0 / jnp.sqrt(hidden_channels_signed))
    if out_channels_unsigned:
        key, kh = jax.random.split(key)
        params["unsigned_head"] = jax.random.normal(
            kh, (hidden_channels_unsigned, out_channels_unsigned), jnp.float32
        ) * (1.0 / jnp.sqrt(hidden_channels_unsigned))
    return params


# ----------------------------------------------------------------------------
# Plain-JAX f32 reference (for correctness check)
# ----------------------------------------------------------------------------
def eign_forward_ref(params, x_signed, x_unsigned):
    for blk in params["blocks"]:
        x_signed = jnp.tanh(x_signed @ blk["w_signed"])
        x_unsigned = jnp.maximum(x_unsigned @ blk["w_unsigned"], 0.0)
    return x_signed @ params["signed_head"], x_unsigned @ params["unsigned_head"]


if __name__ == "__main__":
    # Small deterministic config
    N = 256                      # number of graph entities (rows)
    E = 64                       # number of edges (unused by the linear block)
    in_s, in_u = 4, 4
    hid_s, hid_u = 32, 32
    out_s, out_u = 8, 8
    num_blocks = 2

    key = jax.random.PRNGKey(0)
    key, kxs, kxu, ke, kd, kp = jax.random.split(key, 6)

    x_signed = jax.random.normal(kxs, (N, in_s), jnp.float32)
    x_unsigned = jax.random.normal(kxu, (N, in_u), jnp.float32)
    edge_index = jax.random.randint(ke, (2, E), 0, N, jnp.int32)
    is_directed = jax.random.bernoulli(kd, 0.5, (E,))

    params = init_eign_params(kp, in_s, hid_s, out_s, in_u, hid_u, out_u, num_blocks)

    fwd = jax.jit(eign_forward)

    out_signed, out_unsigned = fwd(params, x_signed, x_unsigned,
                                   edge_index, is_directed)
    jax.block_until_ready(out_signed)
    jax.block_until_ready(out_unsigned)

    ref_s, ref_u = eign_forward_ref(params, x_signed, x_unsigned)
    assert out_signed.shape == (N, out_s)
    assert out_unsigned.shape == (N, out_u)
    # bf16 MXU operands -> compare against the f32 reference at bf16 tolerance
    assert jnp.allclose(out_signed, ref_s, atol=3e-2, rtol=3e-2)
    assert jnp.allclose(out_unsigned, ref_u, atol=3e-2, rtol=3e-2)

    # second check: N not a multiple of the row tile (exercises the partial
    # last-tile path, no wrapper-side padding)
    N2 = 100
    out_s2, out_u2 = fwd(params, x_signed[:N2], x_unsigned[:N2],
                         edge_index, is_directed)
    jax.block_until_ready(out_s2)
    ref_s2, ref_u2 = eign_forward_ref(params, x_signed[:N2], x_unsigned[:N2])
    assert out_s2.shape == (N2, out_s)
    assert out_u2.shape == (N2, out_u)
    assert jnp.allclose(out_s2, ref_s2, atol=3e-2, rtol=3e-2)
    assert jnp.allclose(out_u2, ref_u2, atol=3e-2, rtol=3e-2)

    print("KERNEL_OK")
</pallas_src>

<mosaic_0001>
module attributes {stable_mosaic.version = 11 : i64} {
  func.func @_eign_fused_kernel(%arg0: i32, %arg1: memref<256x4xbf16, #tpu.memory_space<vmem>>, %arg2: memref<256x4xbf16, #tpu.memory_space<vmem>>, %arg3: memref<4x128xbf16, #tpu.memory_space<vmem>>, %arg4: memref<128x128xbf16, #tpu.memory_space<vmem>>, %arg5: memref<4x128xbf16, #tpu.memory_space<vmem>>, %arg6: memref<128x128xbf16, #tpu.memory_space<vmem>>, %arg7: memref<256x128xbf16, #tpu.memory_space<vmem>>, %arg8: memref<256x128xf32, #tpu.memory_space<vmem>>) attributes {dimension_semantics = [#tpu.dimension_semantics<parallel>], iteration_bounds = array<i64: 1>, scalar_prefetch = 0 : i64, scratch_operands = 0 : i64, tpu.core_type = #tpu.core_type<tc>, window_params = [{transform_indices = @transform_0, window_bounds = array<i64: 256, 4>}, {transform_indices = @transform_1, window_bounds = array<i64: 256, 4>}, {pipeline_mode = #tpu.pipeline_mode<synchronous>, transform_indices = @transform_2, window_bounds = array<i64: 4, 128>}, {pipeline_mode = #tpu.pipeline_mode<synchronous>, transform_indices = @transform_3, window_bounds = array<i64: 128, 128>}, {pipeline_mode = #tpu.pipeline_mode<synchronous>, transform_indices = @transform_4, window_bounds = array<i64: 4, 128>}, {pipeline_mode = #tpu.pipeline_mode<synchronous>, transform_indices = @transform_5, window_bounds = array<i64: 128, 128>}, {pipeline_mode = #tpu.pipeline_mode<synchronous>, transform_indices = @transform_6, window_bounds = array<i64: 256, 128>}, {transform_indices = @transform_7, window_bounds = array<i64: 256, 128>}]} {
    %c0 = arith.constant 0 : index
    %c0_0 = arith.constant 0 : index
    %0 = vector.load %arg1[%c0, %c0_0] : memref<256x4xbf16, #tpu.memory_space<vmem>>, vector<256x4xbf16>
    %c0_1 = arith.constant 0 : index
    %c0_2 = arith.constant 0 : index
    %1 = vector.load %arg3[%c0_1, %c0_2] : memref<4x128xbf16, #tpu.memory_space<vmem>>, vector<4x128xbf16>
    %cst = arith.constant dense<0.000000e+00> : vector<256x128xf32>
    %2 = tpu.matmul %0, %1, %cst {dimension_numbers = #tpu.dot_dimension_numbers<[1], [0], [0], [1], [0, 0, 1, 1], [], []>} : vector<256x4xbf16>, vector<4x128xbf16>, vector<256x128xf32> -> vector<256x128xf32>
    %3 = math.tanh %2 : vector<256x128xf32>
    %4 = arith.truncf %3 : vector<256x128xf32> to vector<256x128xbf16>
    %c0_3 = arith.constant 0 : index
    %c0_4 = arith.constant 0 : index
    %5 = vector.load %arg4[%c0_3, %c0_4] : memref<128x128xbf16, #tpu.memory_space<vmem>>, vector<128x128xbf16>
    %cst_5 = arith.constant dense<0.000000e+00> : vector<256x128xf32>
    %6 = tpu.matmul %4, %5, %cst_5 {dimension_numbers = #tpu.dot_dimension_numbers<[1], [0], [0], [1], [0, 0, 1, 1], [], []>} : vector<256x128xbf16>, vector<128x128xbf16>, vector<256x128xf32> -> vector<256x128xf32>
    %7 = math.tanh %6 : vector<256x128xf32>
    %8 = arith.truncf %7 : vector<256x128xf32> to vector<256x128xbf16>
    %c0_6 = arith.constant 0 : index
    %c0_7 = arith.constant 0 : index
    %9 = vector.load %arg2[%c0_6, %c0_7] : memref<256x4xbf16, #tpu.memory_space<vmem>>, vector<256x4xbf16>
    %c0_8 = arith.constant 0 : index
    %c0_9 = arith.constant 0 : index
    %10 = vector.load %arg5[%c0_8, %c0_9] : memref<4x128xbf16, #tpu.memory_space<vmem>>, vector<4x128xbf16>
    %cst_10 = arith.constant dense<0.000000e+00> : vector<256x128xf32>
    %11 = tpu.matmul %9, %10, %cst_10 {dimension_numbers = #tpu.dot_dimension_numbers<[1], [0], [0], [1], [0, 0, 1, 1], [], []>} : vector<256x4xbf16>, vector<4x128xbf16>, vector<256x128xf32> -> vector<256x128xf32>
    %cst_11 = arith.constant 0.000000e+00 : f32
    %12 = vector.broadcast %cst_11 : f32 to vector<256x128xf32>
    %13 = arith.maximumf %11, %12 : vector<256x128xf32>
    %14 = arith.truncf %13 : vector<256x128xf32> to vector<256x128xbf16>
    %c0_12 = arith.constant 0 : index
    %c0_13 = arith.constant 0 : index
    %15 = vector.load %arg6[%c0_12, %c0_13] : memref<128x128xbf16, #tpu.memory_space<vmem>>, vector<128x128xbf16>
    %cst_14 = arith.constant dense<0.000000e+00> : vector<256x128xf32>
    %16 = tpu.matmul %14, %15, %cst_14 {dimension_numbers = #tpu.dot_dimension_numbers<[1], [0], [0], [1], [0, 0, 1, 1], [], []>} : vector<256x128xbf16>, vector<128x128xbf16>, vector<256x128xf32> -> vector<256x128xf32>
    %cst_15 = arith.constant 0.000000e+00 : f32
    %17 = vector.broadcast %cst_15 : f32 to vector<256x128xf32>
    %18 = arith.maximumf %16, %17 : vector<256x128xf32>
    %19 = arith.truncf %18 : vector<256x128xf32> to vector<256x128xbf16>
    %20 = tpu.concatenate %8, %19 in 1 : vector<256x128xbf16>, vector<256x128xbf16> -> vector<256x256xbf16>
    %c0_16 = arith.constant 0 : index
    %c0_17 = arith.constant 0 : index
    %21 = vector.load %arg7[%c0_16, %c0_17] : memref<256x128xbf16, #tpu.memory_space<vmem>>, vector<256x128xbf16>
    %cst_18 = arith.constant dense<0.000000e+00> : vector<256x128xf32>
    %22 = tpu.matmul %20, %21, %cst_18 {dimension_numbers = #tpu.dot_dimension_numbers<[1], [0], [0], [1], [0, 0, 1, 1], [], []>} : vector<256x256xbf16>, vector<256x128xbf16>, vector<256x128xf32> -> vector<256x128xf32>
    %c0_19 = arith.constant 0 : index
    %c0_20 = arith.constant 0 : index
    %23 = vector.load %arg8[%c0_19, %c0_20] : memref<256x128xf32, #tpu.memory_space<vmem>>, vector<256x128xf32>
    tpu.vector_store %arg8[%c0_19, %c0_20], %22 {strides = array<i32>} : memref<256x128xf32, #tpu.memory_space<vmem>>, vector<256x128xf32>,
    return
  }
  func.func @transform_0(%arg0: i32) -> (i32, i32) {
    %c0_i32 = arith.constant 0 : i32
    %c0_i32_0 = arith.constant 0 : i32
    return %arg0, %c0_i32 : i32, i32
  }
  func.func @transform_1(%arg0: i32) -> (i32, i32) {
    %c0_i32 = arith.constant 0 : i32
    %c0_i32_0 = arith.constant 0 : i32
    return %arg0, %c0_i32 : i32, i32
  }
  func.func @transform_2(%arg0: i32) -> (i32, i32) {
    %c0_i32 = arith.constant 0 : i32
    %c0_i32_0 = arith.constant 0 : i32
    %c0_i32_1 = arith.constant 0 : i32
    return %c0_i32, %c0_i32_0 : i32, i32
  }
  func.func @transform_3(%arg0: i32) -> (i32, i32) {
    %c0_i32 = arith.constant 0 : i32
    %c0_i32_0 = arith.constant 0 : i32
    %c0_i32_1 = arith.constant 0 : i32
    return %c0_i32, %c0_i32_0 : i32, i32
  }
  func.func @transform_4(%arg0: i32) -> (i32, i32) {
    %c0_i32 = arith.constant 0 : i32
    %c0_i32_0 = arith.constant 0 : i32
    %c0_i32_1 = arith.constant 0 : i32
    return %c0_i32, %c0_i32_0 : i32, i32
  }
  func.func @transform_5(%arg0: i32) -> (i32, i32) {
    %c0_i32 = arith.constant 0 : i32
    %c0_i32_0 = arith.constant 0 : i32
    %c0_i32_1 = arith.constant 0 : i32
    return %c0_i32, %c0_i32_0 : i32, i32
  }
  func.func @transform_6(%arg0: i32) -> (i32, i32) {
    %c0_i32 = arith.constant 0 : i32
    %c0_i32_0 = arith.constant 0 : i32
    %c0_i32_1 = arith.constant 0 : i32
    return %c0_i32, %c0_i32_0 : i32, i32
  }
  func.func @transform_7(%arg0: i32) -> (i32, i32) {
    %c0_i32 = arith.constant 0 : i32
    %c0_i32_0 = arith.constant 0 : i32
    return %arg0, %c0_i32 : i32, i32
  }
}

</mosaic_0001>

<llo_original>
// kernel: eign_forward.1
$region0: #{eign_forward.1}
  #allocation0 [shape = 'u32[]', space=smem, size = 0x4, offset = 0x4, fixed_abs, tag = 'smem constant byte address 0x4 - core index']
  #allocation1 [shape = 'u32[144,128]{1,0:T(1,128)}', space=vmem, size = 0x12000, scoped, tag = 'internal scratch']
  %s0 = inlined_call_operand.vmem [shape: bf16[256,4], index: 0, kind: input, shape index: {}]
  %s1 = inlined_call_operand.vmem [shape: bf16[256,4], index: 1, kind: input, shape index: {}]
  %s2 = inlined_call_operand.vmem [shape: bf16[4,128], index: 2, kind: input, shape index: {}]
  %s3 = inlined_call_operand.vmem [shape: bf16[128,128], index: 3, kind: input, shape index: {}]
  %s4 = inlined_call_operand.vmem [shape: bf16[4,128], index: 4, kind: input, shape index: {}]
  %s5 = inlined_call_operand.vmem [shape: bf16[128,128], index: 5, kind: input, shape index: {}]
  %s6 = inlined_call_operand.vmem [shape: bf16[256,128], index: 6, kind: input, shape index: {}]
  %s7 = inlined_call_operand.vmem [shape: f32[256,128], index: 7, kind: output, shape index: {}]
  %s8 = sld [smem:[#allocation0]]
  $region38: #{eign_forward.1} parent=0
    _
  %s10 = ssub.s32 1, %s8
  %s11 = scalar_select 0, %s10, %s8
  // Predicated region
  $region2: #{eign_forward.1} parent=0 // pred_check
    _
  $region3: #{eign_forward.1} parent=0 // pred_check_branch
    %13 = sbr.rel (0) target = $region5
  $region4: #{eign_forward.1} parent=0 // pred_region
    _
  $region5: #{eign_forward.1} parent=0 // pred_fallthru
    _
  // Predicated region
  $region6: #{eign_forward.1} parent=0 // pred_check
    _
  $region7: #{eign_forward.1} parent=0 // pred_check_branch
    %15 = sbr.rel (0) target = $region9
  $region8: #{eign_forward.1} parent=0 // pred_region
    _
  $region9: #{eign_forward.1} parent=0 // pred_fallthru
    _
  // Predicated region
  $region10: #{eign_forward.1} parent=0 // pred_check
    _
  $region11: #{eign_forward.1} parent=0 // pred_check_branch
    %17 = sbr.rel (0) target = $region13
  $region12: #{eign_forward.1} parent=0 // pred_region
    _
  $region13: #{eign_forward.1} parent=0 // pred_fallthru
    _
  // Predicated region
  $region14: #{eign_forward.1} parent=0 // pred_check
    _
  $region15: #{eign_forward.1} parent=0 // pred_check_branch
    %19 = sbr.rel (0) target = $region17
  $region16: #{eign_forward.1} parent=0 // pred_region
    _
  $region17: #{eign_forward.1} parent=0 // pred_fallthru
    _
  // Predicated region
  $region18: #{eign_forward.1} parent=0 // pred_check
    _
  $region19: #{eign_forward.1} parent=0 // pred_check_branch
    %21 = sbr.rel (0) target = $region21
  $region20: #{eign_forward.1} parent=0 // pred_region
    _
  $region21: #{eign_forward.1} parent=0 // pred_fallthru
    _
  // Predicated region
  $region22: #{eign_forward.1} parent=0 // pred_check
    _
  $region23: #{eign_forward.1} parent=0 // pred_check_branch
    %23 = sbr.rel (0) target = $region25
  $region24: #{eign_forward.1} parent=0 // pred_region
    _
  $region25: #{eign_forward.1} parent=0 // pred_fallthru
    _
  // Predicated region
  $region26: #{eign_forward.1} parent=0 // pred_check
    _
  $region27: #{eign_forward.1} parent=0 // pred_check_branch
    %25 = sbr.rel (0) target = $region29
  $region28: #{eign_forward.1} parent=0 // pred_region
    _
  $region29: #{eign_forward.1} parent=0 // pred_fallthru
    _
  %v27 = vld [vmem:[%s0] sm:$0xf]
  %v28 = vld [vmem:[%s0 + $0x4] sm:$0xf]
  %v29 = vld [vmem:[%s0 + $0x8] sm:$0xf]
  %v30 = vld [vmem:[%s0 + $0xc] sm:$0xf]
  %v31 = vld [vmem:[%s0 + $0x10] sm:$0xf]
  %v32 = vld [vmem:[%s0 + $0x14] sm:$0xf]
  %v33 = vld [vmem:[%s0 + $0x18] sm:$0xf]
  %v34 = vld [vmem:[%s0 + $0x1c] sm:$0xf]
  %v35 = vld [vmem:[%s0 + $0x20] sm:$0xf]
  %v36 = vld [vmem:[%s0 + $0x24] sm:$0xf]
  %v37 = vld [vmem:[%s0 + $0x28] sm:$0xf]
  %v38 = vld [vmem:[%s0 + $0x2c] sm:$0xf]
  %v39 = vld [vmem:[%s0 + $0x30] sm:$0xf]
  %v40 = vld [vmem:[%s0 + $0x34] sm:$0xf]
  %v41 = vld [vmem:[%s0 + $0x38] sm:$0xf]
  %v42 = vld [vmem:[%s0 + $0x3c] sm:$0xf]
  %v43 = vld [vmem:[%s0 + $0x40] sm:$0xf]
  %v44 = vld [vmem:[%s0 + $0x44] sm:$0xf]
  %v45 = vld [vmem:[%s0 + $0x48] sm:$0xf]
  %v46 = vld [vmem:[%s0 + $0x4c] sm:$0xf]
  %v47 = vld [vmem:[%s0 + $0x50] sm:$0xf]
  %v48 = vld [vmem:[%s0 + $0x54] sm:$0xf]
  %v49 = vld [vmem:[%s0 + $0x58] sm:$0xf]
  %v50 = vld [vmem:[%s0 + $0x5c] sm:$0xf]
  %v51 = vld [vmem:[%s0 + $0x60] sm:$0xf]
  %v52 = vld [vmem:[%s0 + $0x64] sm:$0xf]
  %v53 = vld [vmem:[%s0 + $0x68] sm:$0xf]
  %v54 = vld [vmem:[%s0 + $0x6c] sm:$0xf]
  %v55 = vld [vmem:[%s0 + $0x70] sm:$0xf]
  %v56 = vld [vmem:[%s0 + $0x74] sm:$0xf]
  %v57 = vld [vmem:[%s0 + $0x78] sm:$0xf]
  %v58 = vld [vmem:[%s0 + $0x7c] sm:$0xf]
  %v59 = vld [vmem:[%s2] sm:$0x3]
  %v92 = vunpack.c.l.b16 %v27
  %v93 = vunpack.c.l.b16 %v28
  %v94 = vunpack.c.l.b16 %v29
  %v95 = vunpack.c.l.b16 %v30
  %v96 = vunpack.c.l.b16 %v31
  %v97 = vunpack.c.l.b16 %v32
  %v98 = vunpack.c.l.b16 %v33
  %v99 = vunpack.c.l.b16 %v34
  %v100 = vunpack.c.l.b16 %v35
  %v101 = vunpack.c.l.b16 %v36
  %v102 = vunpack.c.l.b16 %v37
  %v103 = vunpack.c.l.b16 %v38
  %v104 = vunpack.c.l.b16 %v39
  %v105 = vunpack.c.l.b16 %v40
  %v106 = vunpack.c.l.b16 %v41
  %v107 = vunpack.c.l.b16 %v42
  %v108 = vunpack.c.l.b16 %v43
  %v109 = vunpack.c.l.b16 %v44
  %v110 = vunpack.c.l.b16 %v45
  %v111 = vunpack.c.l.b16 %v46
  %v112 = vunpack.c.l.b16 %v47
  %v113 = vunpack.c.l.b16 %v48
  %v114 = vunpack.c.l.b16 %v49
  %v115 = vunpack.c.l.b16 %v50
  %v116 = vunpack.c.l.b16 %v51
  %v117 = vunpack.c.l.b16 %v52
  %v118 = vunpack.c.l.b16 %v53
  %v119 = vunpack.c.l.b16 %v54
  %v120 = vunpack.c.l.b16 %v55
  %v121 = vunpack.c.l.b16 %v56
  %v122 = vunpack.c.l.b16 %v57
  %v123 = vunpack.c.l.b16 %v58
  %v124 = vpack.c.b16 %v93, %v92
  %v125 = vpack.c.b16 %v95, %v94
  %v126 = vpack.c.b16 %v97, %v96
  %v127 = vpack.c.b16 %v99, %v98
  %v128 = vpack.c.b16 %v101, %v100
  %v129 = vpack.c.b16 %v103, %v102
  %v130 = vpack.c.b16 %v105, %v104
  %v131 = vpack.c.b16 %v107, %v106
  %v132 = vpack.c.b16 %v109, %v108
  %v133 = vpack.c.b16 %v111, %v110
  %v134 = vpack.c.b16 %v113, %v112
  %v135 = vpack.c.b16 %v115, %v114
  %v136 = vpack.c.b16 %v117, %v116
  %v137 = vpack.c.b16 %v119, %v118
  %v138 = vpack.c.b16 %v121, %v120
  %v139 = vpack.c.b16 %v123, %v122
  %vm140 = vcmask 31744
  %v142 = vsel %vm140, %v124, 0
  %v145 = vsel %vm140, %v125, 0
  %v148 = vsel %vm140, %v126, 0
  %v151 = vsel %vm140, %v127, 0
  %v154 = vsel %vm140, %v128, 0
  %v157 = vsel %vm140, %v129, 0
  %v160 = vsel %vm140, %v130, 0
  %v163 = vsel %vm140, %v131, 0
  %v166 = vsel %vm140, %v132, 0
  %v169 = vsel %vm140, %v133, 0
  %v172 = vsel %vm140, %v134, 0
  %v175 = vsel %vm140, %v135, 0
  %v178 = vsel %vm140, %v136, 0
  %v181 = vsel %vm140, %v137, 0
  %v184 = vsel %vm140, %v138, 0
  %v187 = vsel %vm140, %v139, 0
  %vm189 = vcmask 1041408
  %v191 = vsel %vm189, %v59, 0
  %193 = vmatprep.subr.bf16.mxu0 0
  %194 = vmatpush1.bf16.msra.mxu0 %v191
  %195 = vmatprep.subr.bf16.mxu0 0
  %196 = vmatpush1.bf16.msra.mxu0 0
  %197 = vmatprep.subr.bf16.mxu0 0
  %198 = vmatpush1.bf16.msra.mxu0 0
  %199 = vmatprep.subr.bf16.mxu0 0
  %200 = vmatpush1.bf16.msra.mxu0 0
  %201 = vmatprep.subr.bf16.mxu0 0
  %202 = vmatpush1.bf16.msra.mxu0 0
  %203 = vmatprep.subr.bf16.mxu0 0
  %204 = vmatpush1.bf16.msra.mxu0 0
  %205 = vmatprep.subr.bf16.mxu0 0
  %206 = vmatpush1.bf16.msra.mxu0 0
  %207 = vmatprep.subr.bf16.mxu0 0
  %208 = vmatpush1.bf16.msra.mxu0 0
  %209 = vmatprep.subr.bf16.mxu0 0
  %210 = vmatpush1.bf16.msra.mxu0 0
  %211 = vmatprep.subr.bf16.mxu0 0
  %212 = vmatpush1.bf16.msra.mxu0 0
  %213 = vmatprep.subr.bf16.mxu0 0
  %214 = vmatpush1.bf16.msra.mxu0 0
  %215 = vmatprep.subr.bf16.mxu0 0
  %216 = vmatpush1.bf16.msra.mxu0 0
  %217 = vmatprep.subr.bf16.mxu0 0
  %218 = vmatpush1.bf16.msra.mxu0 0
  %219 = vmatprep.subr.bf16.mxu0 0
  %220 = vmatpush1.bf16.msra.mxu0 0
  %221 = vmatprep.subr.bf16.mxu0 0
  %222 = vmatpush1.bf16.msra.mxu0 0
  %223 = vmatprep.subr.bf16.mxu0 0
  %224 = vmatpush1.bf16.msra.mxu0 0
  %225 = vmatprep.mubr.bf16.mxu0 0
  %226 = vmatmul.mubr.bf16.gmra.mrb[0].mxu0 %v142
  %v227 = vpop.f32.mrb[0].mxu0
  %v228 = vadd.f32 0.0, %v227
  %v229 = vpop.f32.mrb[0].mxu0
  %v230 = vpop.f32.mrb[0].mxu0
  %v231 = vadd.f32 0.0, %v230
  %v232 = vpop.f32.mrb[0].mxu0
  %233 = vmatprep.mubr.bf16.mxu0 0
  %234 = vmatmul.mubr.bf16.gmra.mrb[0].mxu0 %v145
  %v235 = vpop.f32.mrb[0].mxu0
  %v236 = vadd.f32 0.0, %v235
  %v237 = vpop.f32.mrb[0].mxu0
  %v238 = vpop.f32.mrb[0].mxu0
  %v239 = vadd.f32 0.0, %v238
  %v240 = vpop.f32.mrb[0].mxu0
  %241 = vmatprep.mubr.bf16.mxu0 0
  %242 = vmatmul.mubr.bf16.gmra.mrb[0].mxu0 %v148
  %v243 = vpop.f32.mrb[0].mxu0
  %v244 = vadd.f32 0.0, %v243
  %v245 = vpop.f32.mrb[0].mxu0
  %v246 = vpop.f32.mrb[0].mxu0
  %v247 = vadd.f32 0.0, %v246
  %v248 = vpop.f32.mrb[0].mxu0
  %249 = vmatprep.mubr.bf16.mxu0 0
  %250 = vmatmul.mubr.bf16.gmra.mrb[0].mxu0 %v151
  %v251 = vpop.f32.mrb[0].mxu0
  %v252 = vadd.f32 0.0, %v251
  %v253 = vpop.f32.mrb[0].mxu0
  %v254 = vpop.f32.mrb[0].mxu0
  %v255 = vadd.f32 0.0, %v254
  %v256 = vpop.f32.mrb[0].mxu0
  %257 = vmatprep.mubr.bf16.mxu0 0
  %258 = vmatmul.mubr.bf16.gmra.mrb[0].mxu0 %v154
  %v259 = vpop.f32.mrb[0].mxu0
  %v260 = vadd.f32 0.0, %v259
  %v261 = vpop.f32.mrb[0].mxu0
  %v262 = vpop.f32.mrb[0].mxu0
  %v263 = vadd.f32 0.0, %v262
  %v264 = vpop.f32.mrb[0].mxu0
  %265 = vmatprep.mubr.bf16.mxu0 0
  %266 = vmatmul.mubr.bf16.gmra.mrb[0].mxu0 %v157
  %v267 = vpop.f32.mrb[0].mxu0
  %v268 = vadd.f32 0.0, %v267
  %v269 = vpop.f32.mrb[0].mxu0
  %v270 = vpop.f32.mrb[0].mxu0
  %v271 = vadd.f32 0.0, %v270
  %v272 = vpop.f32.mrb[0].mxu0
  %273 = vmatprep.mubr.bf16.mxu0 0
  %274 = vmatmul.mubr.bf16.gmra.mrb[0].mxu0 %v160
  %v275 = vpop.f32.mrb[0].mxu0
  %v276 = vadd.f32 0.0, %v275
  %v277 = vpop.f32.mrb[0].mxu0
  %v278 = vpop.f32.mrb[0].mxu0
  %v279 = vadd.f32 0.0, %v278
  %v280 = vpop.f32.mrb[0].mxu0
  %281 = vmatprep.mubr.bf16.mxu0 0
  %282 = vmatmul.mubr.bf16.gmra.mrb[0].mxu0 %v163
  %v283 = vpop.f32.mrb[0].mxu0
  %v284 = vadd.f32 0.0, %v283
  %v285 = vpop.f32.mrb[0].mxu0
  %v286 = vpop.f32.mrb[0].mxu0
  %v287 = vadd.f32 0.0, %v286
  %v288 = vpop.f32.mrb[0].mxu0
  %289 = vmatprep.mubr.bf16.mxu0 0
  %290 = vmatmul.mubr.bf16.gmra.mrb[0].mxu0 %v166
  %v291 = vpop.f32.mrb[0].mxu0
  %v292 = vadd.f32 0.0, %v291
  %v293 = vpop.f32.mrb[0].mxu0
  %v294 = vpop.f32.mrb[0].mxu0
  %v295 = vadd.f32 0.0, %v294
  %v296 = vpop.f32.mrb[0].mxu0
  %297 = vmatprep.mubr.bf16.mxu0 0
  %298 = vmatmul.mubr.bf16.gmra.mrb[0].mxu0 %v169
  %v299 = vpop.f32.mrb[0].mxu0
  %v300 = vadd.f32 0.0, %v299
  %v301 = vpop.f32.mrb[0].mxu0
  %v302 = vpop.f32.mrb[0].mxu0
  %v303 = vadd.f32 0.0, %v302
  %v304 = vpop.f32.mrb[0].mxu0
  %305 = vmatprep.mubr.bf16.mxu0 0
  %306 = vmatmul.mubr.bf16.gmra.mrb[0].mxu0 %v172
  %v307 = vpop.f32.mrb[0].mxu0
  %v308 = vadd.f32 0.0, %v307
  %v309 = vpop.f32.mrb[0].mxu0
  %v310 = vpop.f32.mrb[0].mxu0
  %v311 = vadd.f32 0.0, %v310
  %v312 = vpop.f32.mrb[0].mxu0
  %313 = vmatprep.mubr.bf16.mxu0 0
  %314 = vmatmul.mubr.bf16.gmra.mrb[0].mxu0 %v175
  %v315 = vpop.f32.mrb[0].mxu0
  %v316 = vadd.f32 0.0, %v315
  %v317 = vpop.f32.mrb[0].mxu0
  %v318 = vpop.f32.mrb[0].mxu0
  %v319 = vadd.f32 0.0, %v318
  %v320 = vpop.f32.mrb[0].mxu0
  %321 = vmatprep.mubr.bf16.mxu0 0
  %322 = vmatmul.mubr.bf16.gmra.mrb[0].mxu0 %v178
  %v323 = vpop.f32.mrb[0].mxu0
  %v324 = vadd.f32 0.0, %v323
  %v325 = vpop.f32.mrb[0].mxu0
  %v326 = vpop.f32.mrb[0].mxu0
  %v327 = vadd.f32 0.0, %v326
  %v328 = vpop.f32.mrb[0].mxu0
  %329 = vmatprep.mubr.bf16.mxu0 0
  %330 = vmatmul.mubr.bf16.gmra.mrb[0].mxu0 %v181
  %v331 = vpop.f32.mrb[0].mxu0
  %v332 = vadd.f32 0.0, %v331
  %v333 = vpop.f32.mrb[0].mxu0
  %v334 = vpop.f32.mrb[0].mxu0
  %v335 = vadd.f32 0.0, %v334
  %v336 = vpop.f32.mrb[0].mxu0
  %337 = vmatprep.mubr.bf16.mxu0 0
  %338 = vmatmul.mubr.bf16.gmra.mrb[0].mxu0 %v184
  %v339 = vpop.f32.mrb[0].mxu0
  %v340 = vadd.f32 0.0, %v339
  %v341 = vpop.f32.mrb[0].mxu0
  %v342 = vpop.f32.mrb[0].mxu0
  %v343 = vadd.f32 0.0, %v342
  %v344 = vpop.f32.mrb[0].mxu0
  %345 = vmatprep.mubr.bf16.mxu0 0
  %346 = vmatmul.mubr.bf16.gmra.mrb[0].mxu0 %v187
  %v347 = vpop.f32.mrb[0].mxu0
  %v348 = vadd.f32 0.0, %v347
  %v349 = vpop.f32.mrb[0].mxu0
  %v350 = vpop.f32.mrb[0].mxu0
  %v351 = vadd.f32 0.0, %v350
  %v352 = vpop.f32.mrb[0].mxu0
  %353 = vdwg.mxu0
  %v354 = vtanh.pop %v228
  %v355 = vtanh.pop %v231
  %v356 = vtanh.pop %v236
  %v357 = vtanh.pop %v239
  %v358 = vtanh.pop %v244
  %v359 = vtanh.pop %v247
  %v360 = vtanh.pop %v252
  %v361 = vtanh.pop %v255
  %v362 = vtanh.pop %v260
  %v363 = vtanh.pop %v263
  %v364 = vtanh.pop %v268
  %v365 = vtanh.pop %v271
  %v366 = vtanh.pop %v276
  %v367 = vtanh.pop %v279
  %v368 = vtanh.pop %v284
  %v369 = vtanh.pop %v287
  %v370 = vtanh.pop %v292
  %v371 = vtanh.pop %v295
  %v372 = vtanh.pop %v300
  %v373 = vtanh.pop %v303
  %v374 = vtanh.pop %v308
  %v375 = vtanh.pop %v311
  %v376 = vtanh.pop %v316
  %v377 = vtanh.pop %v319
  %v378 = vtanh.pop %v324
  %v379 = vtanh.pop %v327
  %v380 = vtanh.pop %v332
  %v381 = vtanh.pop %v335
  %v382 = vtanh.pop %v340
  %v383 = vtanh.pop %v343
  %v384 = vtanh.pop %v348
  %v385 = vtanh.pop %v351
  %v386 = vpack.c.bf16 %v355, %v354
  %v387 = vpack.c.bf16 %v357, %v356
  %v388 = vpack.c.bf16 %v359, %v358
  %v389 = vpack.c.bf16 %v361, %v360
  %v390 = vpack.c.bf16 %v363, %v362
  %v391 = vpack.c.bf16 %v365, %v364
  %v392 = vpack.c.bf16 %v367, %v366
  %v393 = vpack.c.bf16 %v369, %v368
  %v394 = vpack.c.bf16 %v371, %v370
  %v395 = vpack.c.bf16 %v373, %v372
  %v396 = vpack.c.bf16 %v375, %v374
  %v397 = vpack.c.bf16 %v377, %v376
  %v398 = vpack.c.bf16 %v379, %v378
  %v399 = vpack.c.bf16 %v381, %v380
  %v400 = vpack.c.bf16 %v383, %v382
  %v401 = vpack.c.bf16 %v385, %v384
  %v402 = vld [vmem:[%s3] sm:$0xf]
  %v403 = vld [vmem:[%s3 + $0x4] sm:$0xf]
  %v404 = vld [vmem:[%s3 + $0x8] sm:$0xf]
  %v405 = vld [vmem:[%s3 + $0xc] sm:$0xf]
  %v406 = vld [vmem:[%s3 + $0x10] sm:$0xf]
  %v407 = vld [vmem:[%s3 + $0x14] sm:$0xf]
  %v408 = vld [vmem:[%s3 + $0x18] sm:$0xf]
  %v409 = vld [vmem:[%s3 + $0x1c] sm:$0xf]
  %v410 = vld [vmem:[%s3 + $0x20] sm:$0xf]
  %v411 = vld [vmem:[%s3 + $0x24] sm:$0xf]
  %v412 = vld [vmem:[%s3 + $0x28] sm:$0xf]
  %v413 = vld [vmem:[%s3 + $0x2c] sm:$0xf]
  %v414 = vld [vmem:[%s3 + $0x30] sm:$0xf]
  %v415 = vld [vmem:[%s3 + $0x34] sm:$0xf]
  %v416 = vld [vmem:[%s3 + $0x38] sm:$0xf]
  %v417 = vld [vmem:[%s3 + $0x3c] sm:$0xf]
  %v434 = vunpack.c.l.b16 %v402
  %v435 = vunpack.c.l.b16 %v403
  %v436 = vunpack.c.l.b16 %v404
  %v437 = vunpack.c.l.b16 %v405
  %v438 = vunpack.c.l.b16 %v406
  %v439 = vunpack.c.l.b16 %v407
  %v440 = vunpack.c.l.b16 %v408
  %v441 = vunpack.c.l.b16 %v409
  %v442 = vunpack.c.l.b16 %v410
  %v443 = vunpack.c.l.b16 %v411
  %v444 = vunpack.c.l.b16 %v412
  %v445 = vunpack.c.l.b16 %v413
  %v446 = vunpack.c.l.b16 %v414
  %v447 = vunpack.c.l.b16 %v415
  %v448 = vunpack.c.l.b16 %v416
  %v449 = vunpack.c.l.b16 %v417
  %v450 = vpack.c.b16 %v435, %v434
  %v451 = vpack.c.b16 %v437, %v436
  %v452 = vpack.c.b16 %v439, %v438
  %v453 = vpack.c.b16 %v441, %v440
  %v454 = vpack.c.b16 %v443, %v442
  %v455 = vpack.c.b16 %v445, %v444
  %v456 = vpack.c.b16 %v447, %v446
  %v457 = vpack.c.b16 %v449, %v448
  %466 = vmatprep.subr.bf16.mxu0 0
  %467 = vmatpush1.bf16.msra.mxu0 %v450
  %468 = vmatprep.subr.bf16.mxu0 0
  %469 = vmatpush1.bf16.msra.mxu0 %v451
  %470 = vmatprep.subr.bf16.mxu0 0
  %471 = vmatpush1.bf16.msra.mxu0 %v452
  %472 = vmatprep.subr.bf16.mxu0 0
  %473 = vmatpush1.bf16.msra.mxu0 %v453
  %474 = vmatprep.subr.bf16.mxu0 0
  %475 = vmatpush1.bf16.msra.mxu0 %v454
  %476 = vmatprep.subr.bf16.mxu0 0
  %477 = vmatpush1.bf16.msra.mxu0 %v455
  %478 = vmatprep.subr.bf16.mxu0 0
  %479 = vmatpush1.bf16.msra.mxu0 %v456
  %480 = vmatprep.subr.bf16.mxu0 0
  %481 = vmatpush1.bf16.msra.mxu0 %v457
  %482 = vmatprep.subr.bf16.mxu0 0
  %483 = vmatpush1.bf16.msra.mxu0 0
  %484 = vmatprep.subr.bf16.mxu0 0
  %485 = vmatpush1.bf16.msra.mxu0 0
  %486 = vmatprep.subr.bf16.mxu0 0
  %487 = vmatpush1.bf16.msra.mxu0 0
  %488 = vmatprep.subr.bf16.mxu0 0
  %489 = vmatpush1.bf16.msra.mxu0 0
  %490 = vmatprep.subr.bf16.mxu0 0
  %491 = vmatpush1.bf16.msra.mxu0 0
  %492 = vmatprep.subr.bf16.mxu0 0
  %493 = vmatpush1.bf16.msra.mxu0 0
  %494 = vmatprep.subr.bf16.mxu0 0
  %495 = vmatpush1.bf16.msra.mxu0 0
  %496 = vmatprep.subr.bf16.mxu0 0
  %497 = vmatpush1.bf16.msra.mxu0 0
  %498 = vmatprep.mubr.bf16.mxu0 0
  %499 = vmatmul.mubr.bf16.gmra.mrb[0].mxu0 %v386
  %v500 = vpop.f32.mrb[0].mxu0
  %v501 = vadd.f32 0.0, %v500
  %v502 = vpop.f32.mrb[0].mxu0
  %v503 = vpop.f32.mrb[0].mxu0
  %v504 = vadd.f32 0.0, %v503
  %v505 = vpop.f32.mrb[0].mxu0
  %506 = vmatprep.mubr.bf16.mxu0 0
  %507 = vmatmul.mubr.bf16.gmra.mrb[0].mxu0 %v387
  %v508 = vpop.f32.mrb[0].mxu0
  %v509 = vadd.f32 0.0, %v508
  %v510 = vpop.f32.mrb[0].mxu0
  %v511 = vpop.f32.mrb[0].mxu0
  %v512 = vadd.f32 0.0, %v511
  %v513 = vpop.f32.mrb[0].mxu0
  %514 = vmatprep.mubr.bf16.mxu0 0
  %515 = vmatmul.mubr.bf16.gmra.mrb[0].mxu0 %v388
  %v516 = vpop.f32.mrb[0].mxu0
  %v517 = vadd.f32 0.0, %v516
  %v518 = vpop.f32.mrb[0].mxu0
  %v519 = vpop.f32.mrb[0].mxu0
  %v520 = vadd.f32 0.0, %v519
  %v521 = vpop.f32.mrb[0].mxu0
  %522 = vmatprep.mubr.bf16.mxu0 0
  %523 = vmatmul.mubr.bf16.gmra.mrb[0].mxu0 %v389
  %v524 = vpop.f32.mrb[0].mxu0
  %v525 = vadd.f32 0.0, %v524
  %v526 = vpop.f32.mrb[0].mxu0
  %v527 = vpop.f32.mrb[0].mxu0
  %v528 = vadd.f32 0.0, %v527
  %v529 = vpop.f32.mrb[0].mxu0
  %530 = vmatprep.mubr.bf16.mxu0 0
  %531 = vmatmul.mubr.bf16.gmra.mrb[0].mxu0 %v390
  %v532 = vpop.f32.mrb[0].mxu0
  %v533 = vadd.f32 0.0, %v532
  %v534 = vpop.f32.mrb[0].mxu0
  %v535 = vpop.f32.mrb[0].mxu0
  %v536 = vadd.f32 0.0, %v535
  %v537 = vpop.f32.mrb[0].mxu0
  %538 = vmatprep.mubr.bf16.mxu0 0
  %539 = vmatmul.mubr.bf16.gmra.mrb[0].mxu0 %v391
  %v540 = vpop.f32.mrb[0].mxu0
  %v541 = vadd.f32 0.0, %v540
  %v542 = vpop.f32.mrb[0].mxu0
  %v543 = vpop.f32.mrb[0].mxu0
  %v544 = vadd.f32 0.0, %v543
  %v545 = vpop.f32.mrb[0].mxu0
  %546 = vmatprep.mubr.bf16.mxu0 0
  %547 = vmatmul.mubr.bf16.gmra.mrb[0].mxu0 %v392
  %v548 = vpop.f32.mrb[0].mxu0
  %v549 = vadd.f32 0.0, %v548
  %v550 = vpop.f32.mrb[0].mxu0
  %v551 = vpop.f32.mrb[0].mxu0
  %v552 = vadd.f32 0.0, %v551
  %v553 = vpop.f32.mrb[0].mxu0
  %554 = vmatprep.mubr.bf16.mxu0 0
  %555 = vmatmul.mubr.bf16.gmra.mrb[0].mxu0 %v393
  %v556 = vpop.f32.mrb[0].mxu0
  %v557 = vadd.f32 0.0, %v556
  %v558 = vpop.f32.mrb[0].mxu0
  %v559 = vpop.f32.mrb[0].mxu0
  %v560 = vadd.f32 0.0, %v559
  %v561 = vpop.f32.mrb[0].mxu0
  %562 = vmatprep.mubr.bf16.mxu0 0
  %563 = vmatmul.mubr.bf16.gmra.mrb[0].mxu0 %v394
  %v564 = vpop.f32.mrb[0].mxu0
  %v565 = vadd.f32 0.0, %v564
  %v566 = vpop.f32.mrb[0].mxu0
  %v567 = vpop.f32.mrb[0].mxu0
  %v568 = vadd.f32 0.0, %v567
  %v569 = vpop.f32.mrb[0].mxu0
  %570 = vmatprep.mubr.bf16.mxu0 0
  %571 = vmatmul.mubr.bf16.gmra.mrb[0].mxu0 %v395
  %v572 = vpop.f32.mrb[0].mxu0
  %v573 = vadd.f32 0.0, %v572
  %v574 = vpop.f32.mrb[0].mxu0
  %v575 = vpop.f32.mrb[0].mxu0
  %v576 = vadd.f32 0.0, %v575
  %v577 = vpop.f32.mrb[0].mxu0
  %578 = vmatprep.mubr.bf16.mxu0 0
  %579 = vmatmul.mubr.bf16.gmra.mrb[0].mxu0 %v396
  %v580 = vpop.f32.mrb[0].mxu0
  %v581 = vadd.f32 0.0, %v580
  %v582 = vpop.f32.mrb[0].mxu0
  %v583 = vpop.f32.mrb[0].mxu0
  %v584 = vadd.f32 0.0, %v583
  %v585 = vpop.f32.mrb[0].mxu0
  %586 = vmatprep.mubr.bf16.mxu0 0
  %587 = vmatmul.mubr.bf16.gmra.mrb[0].mxu0 %v397
  %v588 = vpop.f32.mrb[0].mxu0
  %v589 = vadd.f32 0.0, %v588
  %v590 = vpop.f32.mrb[0].mxu0
  %v591 = vpop.f32.mrb[0].mxu0
  %v592 = vadd.f32 0.0, %v591
  %v593 = vpop.f32.mrb[0].mxu0
  %594 = vmatprep.mubr.bf16.mxu0 0
  %595 = vmatmul.mubr.bf16.gmra.mrb[0].mxu0 %v398
  %v596 = vpop.f32.mrb[0].mxu0
  %v597 = vadd.f32 0.0, %v596
  %v598 = vpop.f32.mrb[0].mxu0
  %v599 = vpop.f32.mrb[0].mxu0
  %v600 = vadd.f32 0.0, %v599
  %v601 = vpop.f32.mrb[0].mxu0
  %602 = vmatprep.mubr.bf16.mxu0 0
  %603 = vmatmul.mubr.bf16.gmra.mrb[0].mxu0 %v399
  %v604 = vpop.f32.mrb[0].mxu0
  %v605 = vadd.f32 0.0, %v604
  %v606 = vpop.f32.mrb[0].mxu0
  %v607 = vpop.f32.mrb[0].mxu0
  %v608 = vadd.f32 0.0, %v607
  %v609 = vpop.f32.mrb[0].mxu0
  %610 = vmatprep.mubr.bf16.mxu0 0
  %611 = vmatmul.mubr.bf16.gmra.mrb[0].mxu0 %v400
  %v612 = vpop.f32.mrb[0].mxu0
  %v613 = vadd.f32 0.0, %v612
  %v614 = vpop.f32.mrb[0].mxu0
  %v615 = vpop.f32.mrb[0].mxu0
  %v616 = vadd.f32 0.0, %v615
  %v617 = vpop.f32.mrb[0].mxu0
  %618 = vmatprep.mubr.bf16.mxu0 0
  %619 = vmatmul.mubr.bf16.gmra.mrb[0].mxu0 %v401
  %v620 = vpop.f32.mrb[0].mxu0
  %v621 = vadd.f32 0.0, %v620
  %v622 = vpop.f32.mrb[0].mxu0
  %v623 = vpop.f32.mrb[0].mxu0
  %v624 = vadd.f32 0.0, %v623
  %v625 = vpop.f32.mrb[0].mxu0
  %626 = vdwg.mxu0
  %v627 = vtanh.pop %v501
  %v628 = vtanh.pop %v504
  %v629 = vtanh.pop %v509
  %v630 = vtanh.pop %v512
  %v631 = vtanh.pop %v517
  %v632 = vtanh.pop %v520
  %v633 = vtanh.pop %v525
  %v634 = vtanh.pop %v528
  %v635 = vtanh.pop %v533
  %v636 = vtanh.pop %v536
  %v637 = vtanh.pop %v541
  %v638 = vtanh.pop %v544
  %v639 = vtanh.pop %v549
  %v640 = vtanh.pop %v552
  %v641 = vtanh.pop %v557
  %v642 = vtanh.pop %v560
  %v643 = vtanh.pop %v565
  %v644 = vtanh.pop %v568
  %v645 = vtanh.pop %v573
  %v646 = vtanh.pop %v576
  %v647 = vtanh.pop %v581
  %v648 = vtanh.pop %v584
  %v649 = vtanh.pop %v589
  %v650 = vtanh.pop %v592
  %v651 = vtanh.pop %v597
  %v652 = vtanh.pop %v600
  %v653 = vtanh.pop %v605
  %v654 = vtanh.pop %v608
  %v655 = vtanh.pop %v613
  %v656 = vtanh.pop %v616
  %v657 = vtanh.pop %v621
  %v658 = vtanh.pop %v624
  %v659 = vpack.c.bf16 %v628, %v627
  %v660 = vpack.c.bf16 %v630, %v629
  %v661 = vpack.c.bf16 %v632, %v631
  %v662 = vpack.c.bf16 %v634, %v633
  %v663 = vpack.c.bf16 %v636, %v635
  %v664 = vpack.c.bf16 %v638, %v637
  %v665 = vpack.c.bf16 %v640, %v639
  %v666 = vpack.c.bf16 %v642, %v641
  %v667 = vpack.c.bf16 %v644, %v643
  %v668 = vpack.c.bf16 %v646, %v645
  %v669 = vpack.c.bf16 %v648, %v647
  %v670 = vpack.c.bf16 %v650, %v649
  %v671 = vpack.c.bf16 %v652, %v651
  %v672 = vpack.c.bf16 %v654, %v653
  %v673 = vpack.c.bf16 %v656, %v655
  %v674 = vpack.c.bf16 %v658, %v657
  %v675 = vld [vmem:[%s1] sm:$0xf]
  %v676 = vld [vmem:[%s1 + $0x4] sm:$0xf]
  %v677 = vld [vmem:[%s1 + $0x8] sm:$0xf]
  %v678 = vld [vmem:[%s1 + $0xc] sm:$0xf]
  %v679 = vld [vmem:[%s1 + $0x10] sm:$0xf]
  %v680 = vld [vmem:[%s1 + $0x14] sm:$0xf]
  %v681 = vld [vmem:[%s1 + $0x18] sm:$0xf]
  %v682 = vld [vmem:[%s1 + $0x1c] sm:$0xf]
  %v683 = vld [vmem:[%s1 + $0x20] sm:$0xf]
  %v684 = vld [vmem:[%s1 + $0x24] sm:$0xf]
  %v685 = vld [vmem:[%s1 + $0x28] sm:$0xf]
  %v686 = vld [vmem:[%s1 + $0x2c] sm:$0xf]
  %v687 = vld [vmem:[%s1 + $0x30] sm:$0xf]
  %v688 = vld [vmem:[%s1 + $0x34] sm:$0xf]
  %v689 = vld [vmem:[%s1 + $0x38] sm:$0xf]
  %v690 = vld [vmem:[%s1 + $0x3c] sm:$0xf]
  %v691 = vld [vmem:[%s1 + $0x40] sm:$0xf]
  %v692 = vld [vmem:[%s1 + $0x44] sm:$0xf]
  %v693 = vld [vmem:[%s1 + $0x48] sm:$0xf]
  %v694 = vld [vmem:[%s1 + $0x4c] sm:$0xf]
  %v695 = vld [vmem:[%s1 + $0x50] sm:$0xf]
  %v696 = vld [vmem:[%s1 + $0x54] sm:$0xf]
  %v697 = vld [vmem:[%s1 + $0x58] sm:$0xf]
  %v698 = vld [vmem:[%s1 + $0x5c] sm:$0xf]
  %v699 = vld [vmem:[%s1 + $0x60] sm:$0xf]
  %v700 = vld [vmem:[%s1 + $0x64] sm:$0xf]
  %v701 = vld [vmem:[%s1 + $0x68] sm:$0xf]
  %v702 = vld [vmem:[%s1 + $0x6c] sm:$0xf]
  %v703 = vld [vmem:[%s1 + $0x70] sm:$0xf]
  %v704 = vld [vmem:[%s1 + $0x74] sm:$0xf]
  %v705 = vld [vmem:[%s1 + $0x78] sm:$0xf]
  %v706 = vld [vmem:[%s1 + $0x7c] sm:$0xf]
  %v707 = vld [vmem:[%s4] sm:$0x3]
  %v740 = vunpack.c.l.b16 %v675
  %v741 = vunpack.c.l.b16 %v676
  %v742 = vunpack.c.l.b16 %v677
  %v743 = vunpack.c.l.b16 %v678
  %v744 = vunpack.c.l.b16 %v679
  %v745 = vunpack.c.l.b16 %v680
  %v746 = vunpack.c.l.b16 %v681
  %v747 = vunpack.c.l.b16 %v682
  %v748 = vunpack.c.l.b16 %v683
  %v749 = vunpack.c.l.b16 %v684
  %v750 = vunpack.c.l.b16 %v685
  %v751 = vunpack.c.l.b16 %v686
  %v752 = vunpack.c.l.b16 %v687
  %v753 = vunpack.c.l.b16 %v688
  %v754 = vunpack.c.l.b16 %v689
  %v755 = vunpack.c.l.b16 %v690
  %v756 = vunpack.c.l.b16 %v691
  %v757 = vunpack.c.l.b16 %v692
  %v758 = vunpack.c.l.b16 %v693
  %v759 = vunpack.c.l.b16 %v694
  %v760 = vunpack.c.l.b16 %v695
  %v761 = vunpack.c.l.b16 %v696
  %v762 = vunpack.c.l.b16 %v697
  %v763 = vunpack.c.l.b16 %v698
  %v764 = vunpack.c.l.b16 %v699
  %v765 = vunpack.c.l.b16 %v700
  %v766 = vunpack.c.l.b16 %v701
  %v767 = vunpack.c.l.b16 %v702
  %v768 = vunpack.c.l.b16 %v703
  %v769 = vunpack.c.l.b16 %v704
  %v770 = vunpack.c.l.b16 %v705
  %v771 = vunpack.c.l.b16 %v706
  %v772 = vpack.c.b16 %v741, %v740
  %v773 = vpack.c.b16 %v743, %v742
  %v774 = vpack.c.b16 %v745, %v744
  %v775 = vpack.c.b16 %v747, %v746
  %v776 = vpack.c.b16 %v749, %v748
  %v777 = vpack.c.b16 %v751, %v750
  %v778 = vpack.c.b16 %v753, %v752
  %v779 = vpack.c.b16 %v755, %v754
  %v780 = vpack.c.b16 %v757, %v756
  %v781 = vpack.c.b16 %v759, %v758
  %v782 = vpack.c.b16 %v761, %v760
  %v783 = vpack.c.b16 %v763, %v762
  %v784 = vpack.c.b16 %v765, %v764
  %v785 = vpack.c.b16 %v767, %v766
  %v786 = vpack.c.b16 %v769, %v768
  %v787 = vpack.c.b16 %v771, %v770
  %v789 = vsel %vm140, %v772, 0
  %v792 = vsel %vm140, %v773, 0
  %v795 = vsel %vm140, %v774, 0
  %v798 = vsel %vm140, %v775, 0
  %v801 = vsel %vm140, %v776, 0
  %v804 = vsel %vm140, %v777, 0
  %v807 = vsel %vm140, %v778, 0
  %v810 = vsel %vm140, %v779, 0
  %v813 = vsel %vm140, %v780, 0
  %v816 = vsel %vm140, %v781, 0
  %v819 = vsel %vm140, %v782, 0
  %v822 = vsel %vm140, %v783, 0
  %v825 = vsel %vm140, %v784, 0
  %v828 = vsel %vm140, %v785, 0
  %v831 = vsel %vm140, %v786, 0
  %v834 = vsel %vm140, %v787, 0
  %v837 = vsel %vm189, %v707, 0
  %839 = vmatprep.subr.bf16.mxu0 0
  %840 = vmatpush1.bf16.msra.mxu0 %v837
  %841 = vmatprep.subr.bf16.mxu0 0
  %842 = vmatpush1.bf16.msra.mxu0 0
  %843 = vmatprep.subr.bf16.mxu0 0
  %844 = vmatpush1.bf16.msra.mxu0 0
  %845 = vmatprep.subr.bf16.mxu0 0
  %846 = vmatpush1.bf16.msra.mxu0 0
  %847 = vmatprep.subr.bf16.mxu0 0
  %848 = vmatpush1.bf16.msra.mxu0 0
  %849 = vmatprep.subr.bf16.mxu0 0
  %850 = vmatpush1.bf16.msra.mxu0 0
  %851 = vmatprep.subr.bf16.mxu0 0
  %852 = vmatpush1.bf16.msra.mxu0 0
  %853 = vmatprep.subr.bf16.mxu0 0
  %854 = vmatpush1.bf16.msra.mxu0 0
  %855 = vmatprep.subr.bf16.mxu0 0
  %856 = vmatpush1.bf16.msra.mxu0 0
  %857 = vmatprep.subr.bf16.mxu0 0
  %858 = vmatpush1.bf16.msra.mxu0 0
  %859 = vmatprep.subr.bf16.mxu0 0
  %860 = vmatpush1.bf16.msra.mxu0 0
  %861 = vmatprep.subr.bf16.mxu0 0
  %862 = vmatpush1.bf16.msra.mxu0 0
  %863 = vmatprep.subr.bf16.mxu0 0
  %864 = vmatpush1.bf16.msra.mxu0 0
  %865 = vmatprep.subr.bf16.mxu0 0
  %866 = vmatpush1.bf16.msra.mxu0 0
  %867 = vmatprep.subr.bf16.mxu0 0
  %868 = vmatpush1.bf16.msra.mxu0 0
  %869 = vmatprep.subr.bf16.mxu0 0
  %870 = vmatpush1.bf16.msra.mxu0 0
  %871 = vmatprep.mubr.bf16.mxu0 0
  %872 = vmatmul.mubr.bf16.gmra.mrb[0].mxu0 %v789
  %v873 = vpop.f32.mrb[0].mxu0
  %v874 = vadd.f32 0.0, %v873
  %v875 = vpop.f32.mrb[0].mxu0
  %v876 = vpop.f32.mrb[0].mxu0
  %v877 = vadd.f32 0.0, %v876
  %v878 = vpop.f32.mrb[0].mxu0
  %879 = vmatprep.mubr.bf16.mxu0 0
  %880 = vmatmul.mubr.bf16.gmra.mrb[0].mxu0 %v792
  %v881 = vpop.f32.mrb[0].mxu0
  %v882 = vadd.f32 0.0, %v881
  %v883 = vpop.f32.mrb[0].mxu0
  %v884 = vpop.f32.mrb[0].mxu0
  %v885 = vadd.f32 0.0, %v884
  %v886 = vpop.f32.mrb[0].mxu0
  %887 = vmatprep.mubr.bf16.mxu0 0
  %888 = vmatmul.mubr.bf16.gmra.mrb[0].mxu0 %v795
  %v889 = vpop.f32.mrb[0].mxu0
  %v890 = vadd.f32 0.0, %v889
  %v891 = vpop.f32.mrb[0].mxu0
  %v892 = vpop.f32.mrb[0].mxu0
  %v893 = vadd.f32 0.0, %v892
  %v894 = vpop.f32.mrb[0].mxu0
  %895 = vmatprep.mubr.bf16.mxu0 0
  %896 = vmatmul.mubr.bf16.gmra.mrb[0].mxu0 %v798
  %v897 = vpop.f32.mrb[0].mxu0
  %v898 = vadd.f32 0.0, %v897
  %v899 = vpop.f32.mrb[0].mxu0
  %v900 = vpop.f32.mrb[0].mxu0
  %v901 = vadd.f32 0.0, %v900
  %v902 = vpop.f32.mrb[0].mxu0
  %903 = vmatprep.mubr.bf16.mxu0 0
  %904 = vmatmul.mubr.bf16.gmra.mrb[0].mxu0 %v801
  %v905 = vpop.f32.mrb[0].mxu0
  %v906 = vadd.f32 0.0, %v905
  %v907 = vpop.f32.mrb[0].mxu0
  %v908 = vpop.f32.mrb[0].mxu0
  %v909 = vadd.f32 0.0, %v908
  %v910 = vpop.f32.mrb[0].mxu0
  %911 = vmatprep.mubr.bf16.mxu0 0
  %912 = vmatmul.mubr.bf16.gmra.mrb[0].mxu0 %v804
  %v913 = vpop.f32.mrb[0].mxu0
  %v914 = vadd.f32 0.0, %v913
  %v915 = vpop.f32.mrb[0].mxu0
  %v916 = vpop.f32.mrb[0].mxu0
  %v917 = vadd.f32 0.0, %v916
  %v918 = vpop.f32.mrb[0].mxu0
  %919 = vmatprep.mubr.bf16.mxu0 0
  %920 = vmatmul.mubr.bf16.gmra.mrb[0].mxu0 %v807
  %v921 = vpop.f32.mrb[0].mxu0
  %v922 = vadd.f32 0.0, %v921
  %v923 = vpop.f32.mrb[0].mxu0
  %v924 = vpop.f32.mrb[0].mxu0
  %v925 = vadd.f32 0.0, %v924
  %v926 = vpop.f32.mrb[0].mxu0
  %927 = vmatprep.mubr.bf16.mxu0 0
  %928 = vmatmul.mubr.bf16.gmra.mrb[0].mxu0 %v810
  %v929 = vpop.f32.mrb[0].mxu0
  %v930 = vadd.f32 0.0, %v929
  %v931 = vpop.f32.mrb[0].mxu0
  %v932 = vpop.f32.mrb[0].mxu0
  %v933 = vadd.f32 0.0, %v932
  %v934 = vpop.f32.mrb[0].mxu0
  %935 = vmatprep.mubr.bf16.mxu0 0
  %936 = vmatmul.mubr.bf16.gmra.mrb[0].mxu0 %v813
  %v937 = vpop.f32.mrb[0].mxu0
  %v938 = vadd.f32 0.0, %v937
  %v939 = vpop.f32.mrb[0].mxu0
  %v940 = vpop.f32.mrb[0].mxu0
  %v941 = vadd.f32 0.0, %v940
  %v942 = vpop.f32.mrb[0].mxu0
  %943 = vmatprep.mubr.bf16.mxu0 0
  %944 = vmatmul.mubr.bf16.gmra.mrb[0].mxu0 %v816
  %v945 = vpop.f32.mrb[0].mxu0
  %v946 = vadd.f32 0.0, %v945
  %v947 = vpop.f32.mrb[0].mxu0
  %v948 = vpop.f32.mrb[0].mxu0
  %v949 = vadd.f32 0.0, %v948
  %v950 = vpop.f32.mrb[0].mxu0
  %951 = vmatprep.mubr.bf16.mxu0 0
  %952 = vmatmul.mubr.bf16.gmra.mrb[0].mxu0 %v819
  %v953 = vpop.f32.mrb[0].mxu0
  %v954 = vadd.f32 0.0, %v953
  %v955 = vpop.f32.mrb[0].mxu0
  %v956 = vpop.f32.mrb[0].mxu0
  %v957 = vadd.f32 0.0, %v956
  %v958 = vpop.f32.mrb[0].mxu0
  %959 = vmatprep.mubr.bf16.mxu0 0
  %960 = vmatmul.mubr.bf16.gmra.mrb[0].mxu0 %v822
  %v961 = vpop.f32.mrb[0].mxu0
  %v962 = vadd.f32 0.0, %v961
  %v963 = vpop.f32.mrb[0].mxu0
  %v964 = vpop.f32.mrb[0].mxu0
  %v965 = vadd.f32 0.0, %v964
  %v966 = vpop.f32.mrb[0].mxu0
  %967 = vmatprep.mubr.bf16.mxu0 0
  %968 = vmatmul.mubr.bf16.gmra.mrb[0].mxu0 %v825
  %v969 = vpop.f32.mrb[0].mxu0
  %v970 = vadd.f32 0.0, %v969
  %v971 = vpop.f32.mrb[0].mxu0
  %v972 = vpop.f32.mrb[0].mxu0
  %v973 = vadd.f32 0.0, %v972
  %v974 = vpop.f32.mrb[0].mxu0
  %975 = vmatprep.mubr.bf16.mxu0 0
  %976 = vmatmul.mubr.bf16.gmra.mrb[0].mxu0 %v828
  %v977 = vpop.f32.mrb[0].mxu0
  %v978 = vadd.f32 0.0, %v977
  %v979 = vpop.f32.mrb[0].mxu0
  %v980 = vpop.f32.mrb[0].mxu0
  %v981 = vadd.f32 0.0, %v980
  %v982 = vpop.f32.mrb[0].mxu0
  %983 = vmatprep.mubr.bf16.mxu0 0
  %984 = vmatmul.mubr.bf16.gmra.mrb[0].mxu0 %v831
  %v985 = vpop.f32.mrb[0].mxu0
  %v986 = vadd.f32 0.0, %v985
  %v987 = vpop.f32.mrb[0].mxu0
  %v988 = vpop.f32.mrb[0].mxu0
  %v989 = vadd.f32 0.0, %v988
  %v990 = vpop.f32.mrb[0].mxu0
  %991 = vmatprep.mubr.bf16.mxu0 0
  %992 = vmatmul.mubr.bf16.gmra.mrb[0].mxu0 %v834
  %v993 = vpop.f32.mrb[0].mxu0
  %v994 = vadd.f32 0.0, %v993
  %v995 = vpop.f32.mrb[0].mxu0
  %v996 = vpop.f32.mrb[0].mxu0
  %v997 = vadd.f32 0.0, %v996
  %v998 = vpop.f32.mrb[0].mxu0
  %999 = vdwg.mxu0
  %v1000 = vmax.f32 %v874, 0.0
  %v1001 = vmax.f32 %v877, 0.0
  %v1002 = vmax.f32 %v882, 0.0
  %v1003 = vmax.f32 %v885, 0.0
  %v1004 = vmax.f32 %v890, 0.0
  %v1005 = vmax.f32 %v893, 0.0
  %v1006 = vmax.f32 %v898, 0.0
  %v1007 = vmax.f32 %v901, 0.0
  %v1008 = vmax.f32 %v906, 0.0
  %v1009 = vmax.f32 %v909, 0.0
  %v1010 = vmax.f32 %v914, 0.0
  %v1011 = vmax.f32 %v917, 0.0
  %v1012 = vmax.f32 %v922, 0.0
  %v1013 = vmax.f32 %v925, 0.0
  %v1014 = vmax.f32 %v930, 0.0
  %v1015 = vmax.f32 %v933, 0.0
  %v1016 = vmax.f32 %v938, 0.0
  %v1017 = vmax.f32 %v941, 0.0
  %v1018 = vmax.f32 %v946, 0.0
  %v1019 = vmax.f32 %v949, 0.0
  %v1020 = vmax.f32 %v954, 0.0
  %v1021 = vmax.f32 %v957, 0.0
  %v1022 = vmax.f32 %v962, 0.0
  %v1023 = vmax.f32 %v965, 0.0
  %v1024 = vmax.f32 %v970, 0.0
  %v1025 = vmax.f32 %v973, 0.0
  %v1026 = vmax.f32 %v978, 0.0
  %v1027 = vmax.f32 %v981, 0.0
  %v1028 = vmax.f32 %v986, 0.0
  %v1029 = vmax.f32 %v989, 0.0
  %v1030 = vmax.f32 %v994, 0.0
  %v1031 = vmax.f32 %v997, 0.0
  %v1032 = vpack.c.bf16 %v1001, %v1000
  %v1033 = vpack.c.bf16 %v1003, %v1002
  %v1034 = vpack.c.bf16 %v1005, %v1004
  %v1035 = vpack.c.bf16 %v1007, %v1006
  %v1036 = vpack.c.bf16 %v1009, %v1008
  %v1037 = vpack.c.bf16 %v1011, %v1010
  %v1038 = vpack.c.bf16 %v1013, %v1012
  %v1039 = vpack.c.bf16 %v1015, %v1014
  %v1040 = vpack.c.bf16 %v1017, %v1016
  %v1041 = vpack.c.bf16 %v1019, %v1018
  %v1042 = vpack.c.bf16 %v1021, %v1020
  %v1043 = vpack.c.bf16 %v1023, %v1022
  %v1044 = vpack.c.bf16 %v1025, %v1024
  %v1045 = vpack.c.bf16 %v1027, %v1026
  %v1046 = vpack.c.bf16 %v1029, %v1028
  %v1047 = vpack.c.bf16 %v1031, %v1030
  %v1048 = vld [vmem:[%s5] sm:$0xf]
  %v1049 = vld [vmem:[%s5 + $0x4] sm:$0xf]
  %v1050 = vld [vmem:[%s5 + $0x8] sm:$0xf]
  %v1051 = vld [vmem:[%s5 + $0xc] sm:$0xf]
  %v1052 = vld [vmem:[%s5 + $0x10] sm:$0xf]
  %v1053 = vld [vmem:[%s5 + $0x14] sm:$0xf]
  %v1054 = vld [vmem:[%s5 + $0x18] sm:$0xf]
  %v1055 = vld [vmem:[%s5 + $0x1c] sm:$0xf]
  %v1056 = vld [vmem:[%s5 + $0x20] sm:$0xf]
  %v1057 = vld [vmem:[%s5 + $0x24] sm:$0xf]
  %v1058 = vld [vmem:[%s5 + $0x28] sm:$0xf]
  %v1059 = vld [vmem:[%s5 + $0x2c] sm:$0xf]
  %v1060 = vld [vmem:[%s5 + $0x30] sm:$0xf]
  %v1061 = vld [vmem:[%s5 + $0x34] sm:$0xf]
  %v1062 = vld [vmem:[%s5 + $0x38] sm:$0xf]
  %v1063 = vld [vmem:[%s5 + $0x3c] sm:$0xf]
  %v1080 = vunpack.c.l.b16 %v1048
  %v1081 = vunpack.c.l.b16 %v1049
  %v1082 = vunpack.c.l.b16 %v1050
  %v1083 = vunpack.c.l.b16 %v1051
  %v1084 = vunpack.c.l.b16 %v1052
  %v1085 = vunpack.c.l.b16 %v1053
  %v1086 = vunpack.c.l.b16 %v1054
  %v1087 = vunpack.c.l.b16 %v1055
  %v1088 = vunpack.c.l.b16 %v1056
  %v1089 = vunpack.c.l.b16 %v1057
  %v1090 = vunpack.c.l.b16 %v1058
  %v1091 = vunpack.c.l.b16 %v1059
  %v1092 = vunpack.c.l.b16 %v1060
  %v1093 = vunpack.c.l.b16 %v1061
  %v1094 = vunpack.c.l.b16 %v1062
  %v1095 = vunpack.c.l.b16 %v1063
  %v1096 = vpack.c.b16 %v1081, %v1080
  %v1097 = vpack.c.b16 %v1083, %v1082
  %v1098 = vpack.c.b16 %v1085, %v1084
  %v1099 = vpack.c.b16 %v1087, %v1086
  %v1100 = vpack.c.b16 %v1089, %v1088
  %v1101 = vpack.c.b16 %v1091, %v1090
  %v1102 = vpack.c.b16 %v1093, %v1092
  %v1103 = vpack.c.b16 %v1095, %v1094
  %1112 = vmatprep.subr.bf16.mxu0 0
  %1113 = vmatpush1.bf16.msra.mxu0 %v1096
  %1114 = vmatprep.subr.bf16.mxu0 0
  %1115 = vmatpush1.bf16.msra.mxu0 %v1097
  %1116 = vmatprep.subr.bf16.mxu0 0
  %1117 = vmatpush1.bf16.msra.mxu0 %v1098
  %1118 = vmatprep.subr.bf16.mxu0 0
  %1119 = vmatpush1.bf16.msra.mxu0 %v1099
  %1120 = vmatprep.subr.bf16.mxu0 0
  %1121 = vmatpush1.bf16.msra.mxu0 %v1100
  %1122 = vmatprep.subr.bf16.mxu0 0
  %1123 = vmatpush1.bf16.msra.mxu0 %v1101
  %1124 = vmatprep.subr.bf16.mxu0 0
  %1125 = vmatpush1.bf16.msra.mxu0 %v1102
  %1126 = vmatprep.subr.bf16.mxu0 0
  %1127 = vmatpush1.bf16.msra.mxu0 %v1103
  %1128 = vmatprep.subr.bf16.mxu0 0
  %1129 = vmatpush1.bf16.msra.mxu0 0
  %1130 = vmatprep.subr.bf16.mxu0 0
  %1131 = vmatpush1.bf16.msra.mxu0 0
  %1132 = vmatprep.subr.bf16.mxu0 0
  %1133 = vmatpush1.bf16.msra.mxu0 0
  %1134 = vmatprep.subr.bf16.mxu0 0
  %1135 = vmatpush1.bf16.msra.mxu0 0
  %1136 = vmatprep.subr.bf16.mxu0 0
  %1137 = vmatpush1.bf16.msra.mxu0 0
  %1138 = vmatprep.subr.bf16.mxu0 0
  %1139 = vmatpush1.bf16.msra.mxu0 0
  %1140 = vmatprep.subr.bf16.mxu0 0
  %1141 = vmatpush1.bf16.msra.mxu0 0
  %1142 = vmatprep.subr.bf16.mxu0 0
  %1143 = vmatpush1.bf16.msra.mxu0 0
  %1144 = vmatprep.mubr.bf16.mxu0 0
  %1145 = vmatmul.mubr.bf16.gmra.mrb[0].mxu0 %v1032
  %v1146 = vpop.f32.mrb[0].mxu0
  %v1147 = vadd.f32 0.0, %v1146
  %v1148 = vpop.f32.mrb[0].mxu0
  %v1149 = vpop.f32.mrb[0].mxu0
  %v1150 = vadd.f32 0.0, %v1149
  %v1151 = vpop.f32.mrb[0].mxu0
  %1152 = vmatprep.mubr.bf16.mxu0 0
  %1153 = vmatmul.mubr.bf16.gmra.mrb[0].mxu0 %v1033
  %v1154 = vpop.f32.mrb[0].mxu0
  %v1155 = vadd.f32 0.0, %v1154
  %v1156 = vpop.f32.mrb[0].mxu0
  %v1157 = vpop.f32.mrb[0].mxu0
  %v1158 = vadd.f32 0.0, %v1157
  %v1159 = vpop.f32.mrb[0].mxu0
  %1160 = vmatprep.mubr.bf16.mxu0 0
  %1161 = vmatmul.mubr.bf16.gmra.mrb[0].mxu0 %v1034
  %v1162 = vpop.f32.mrb[0].mxu0
  %v1163 = vadd.f32 0.0, %v1162
  %v1164 = vpop.f32.mrb[0].mxu0
  %v1165 = vpop.f32.mrb[0].mxu0
  %v1166 = vadd.f32 0.0, %v1165
  %v1167 = vpop.f32.mrb[0].mxu0
  %1168 = vmatprep.mubr.bf16.mxu0 0
  %1169 = vmatmul.mubr.bf16.gmra.mrb[0].mxu0 %v1035
  %v1170 = vpop.f32.mrb[0].mxu0
  %v1171 = vadd.f32 0.0, %v1170
  %v1172 = vpop.f32.mrb[0].mxu0
  %v1173 = vpop.f32.mrb[0].mxu0
  %v1174 = vadd.f32 0.0, %v1173
  %v1175 = vpop.f32.mrb[0].mxu0
  %1176 = vmatprep.mubr.bf16.mxu0 0
  %1177 = vmatmul.mubr.bf16.gmra.mrb[0].mxu0 %v1036
  %v1178 = vpop.f32.mrb[0].mxu0
  %v1179 = vadd.f32 0.0, %v1178
  %v1180 = vpop.f32.mrb[0].mxu0
  %v1181 = vpop.f32.mrb[0].mxu0
  %v1182 = vadd.f32 0.0, %v1181
  %v1183 = vpop.f32.mrb[0].mxu0
  %1184 = vmatprep.mubr.bf16.mxu0 0
  %1185 = vmatmul.mubr.bf16.gmra.mrb[0].mxu0 %v1037
  %v1186 = vpop.f32.mrb[0].mxu0
  %v1187 = vadd.f32 0.0, %v1186
  %v1188 = vpop.f32.mrb[0].mxu0
  %v1189 = vpop.f32.mrb[0].mxu0
  %v1190 = vadd.f32 0.0, %v1189
  %v1191 = vpop.f32.mrb[0].mxu0
  %1192 = vmatprep.mubr.bf16.mxu0 0
  %1193 = vmatmul.mubr.bf16.gmra.mrb[0].mxu0 %v1038
  %v1194 = vpop.f32.mrb[0].mxu0
  %v1195 = vadd.f32 0.0, %v1194
  %v1196 = vpop.f32.mrb[0].mxu0
  %v1197 = vpop.f32.mrb[0].mxu0
  %v1198 = vadd.f32 0.0, %v1197
  %v1199 = vpop.f32.mrb[0].mxu0
  %1200 = vmatprep.mubr.bf16.mxu0 0
  %1201 = vmatmul.mubr.bf16.gmra.mrb[0].mxu0 %v1039
  %v1202 = vpop.f32.mrb[0].mxu0
  %v1203 = vadd.f32 0.0, %v1202
  %v1204 = vpop.f32.mrb[0].mxu0
  %v1205 = vpop.f32.mrb[0].mxu0
  %v1206 = vadd.f32 0.0, %v1205
  %v1207 = vpop.f32.mrb[0].mxu0
  %1208 = vmatprep.mubr.bf16.mxu0 0
  %1209 = vmatmul.mubr.bf16.gmra.mrb[0].mxu0 %v1040
  %v1210 = vpop.f32.mrb[0].mxu0
  %v1211 = vadd.f32 0.0, %v1210
  %v1212 = vpop.f32.mrb[0].mxu0
  %v1213 = vpop.f32.mrb[0].mxu0
  %v1214 = vadd.f32 0.0, %v1213
  %v1215 = vpop.f32.mrb[0].mxu0
  %1216 = vmatprep.mubr.bf16.mxu0 0
  %1217 = vmatmul.mubr.bf16.gmra.mrb[0].mxu0 %v1041
  %v1218 = vpop.f32.mrb[0].mxu0
  %v1219 = vadd.f32 0.0, %v1218
  %v1220 = vpop.f32.mrb[0].mxu0
  %v1221 = vpop.f32.mrb[0].mxu0
  %v1222 = vadd.f32 0.0, %v1221
  %v1223 = vpop.f32.mrb[0].mxu0
  %1224 = vmatprep.mubr.bf16.mxu0 0
  %1225 = vmatmul.mubr.bf16.gmra.mrb[0].mxu0 %v1042
  %v1226 = vpop.f32.mrb[0].mxu0
  %v1227 = vadd.f32 0.0, %v1226
  %v1228 = vpop.f32.mrb[0].mxu0
  %v1229 = vpop.f32.mrb[0].mxu0
  %v1230 = vadd.f32 0.0, %v1229
  %v1231 = vpop.f32.mrb[0].mxu0
  %1232 = vmatprep.mubr.bf16.mxu0 0
  %1233 = vmatmul.mubr.bf16.gmra.mrb[0].mxu0 %v1043
  %v1234 = vpop.f32.mrb[0].mxu0
  %v1235 = vadd.f32 0.0, %v1234
  %v1236 = vpop.f32.mrb[0].mxu0
  %v1237 = vpop.f32.mrb[0].mxu0
  %v1238 = vadd.f32 0.0, %v1237
  %v1239 = vpop.f32.mrb[0].mxu0
  %1240 = vmatprep.mubr.bf16.mxu0 0
  %1241 = vmatmul.mubr.bf16.gmra.mrb[0].mxu0 %v1044
  %v1242 = vpop.f32.mrb[0].mxu0
  %v1243 = vadd.f32 0.0, %v1242
  %v1244 = vpop.f32.mrb[0].mxu0
  %v1245 = vpop.f32.mrb[0].mxu0
  %v1246 = vadd.f32 0.0, %v1245
  %v1247 = vpop.f32.mrb[0].mxu0
  %1248 = vmatprep.mubr.bf16.mxu0 0
  %1249 = vmatmul.mubr.bf16.gmra.mrb[0].mxu0 %v1045
  %v1250 = vpop.f32.mrb[0].mxu0
  %v1251 = vadd.f32 0.0, %v1250
  %v1252 = vpop.f32.mrb[0].mxu0
  %v1253 = vpop.f32.mrb[0].mxu0
  %v1254 = vadd.f32 0.0, %v1253
  %v1255 = vpop.f32.mrb[0].mxu0
  %1256 = vmatprep.mubr.bf16.mxu0 0
  %1257 = vmatmul.mubr.bf16.gmra.mrb[0].mxu0 %v1046
  %v1258 = vpop.f32.mrb[0].mxu0
  %v1259 = vadd.f32 0.0, %v1258
  %v1260 = vpop.f32.mrb[0].mxu0
  %v1261 = vpop.f32.mrb[0].mxu0
  %v1262 = vadd.f32 0.0, %v1261
  %v1263 = vpop.f32.mrb[0].mxu0
  %1264 = vmatprep.mubr.bf16.mxu0 0
  %1265 = vmatmul.mubr.bf16.gmra.mrb[0].mxu0 %v1047
  %v1266 = vpop.f32.mrb[0].mxu0
  %v1267 = vadd.f32 0.0, %v1266
  %v1268 = vpop.f32.mrb[0].mxu0
  %v1269 = vpop.f32.mrb[0].mxu0
  %v1270 = vadd.f32 0.0, %v1269
  %v1271 = vpop.f32.mrb[0].mxu0
  %1272 = vdwg.mxu0
  %v1273 = vmax.f32 %v1147, 0.0
  %v1274 = vmax.f32 %v1150, 0.0
  %v1275 = vmax.f32 %v1155, 0.0
  %v1276 = vmax.f32 %v1158, 0.0
  %v1277 = vmax.f32 %v1163, 0.0
  %v1278 = vmax.f32 %v1166, 0.0
  %v1279 = vmax.f32 %v1171, 0.0
  %v1280 = vmax.f32 %v1174, 0.0
  %v1281 = vmax.f32 %v1179, 0.0
  %v1282 = vmax.f32 %v1182, 0.0
  %v1283 = vmax.f32 %v1187, 0.0
  %v1284 = vmax.f32 %v1190, 0.0
  %v1285 = vmax.f32 %v1195, 0.0
  %v1286 = vmax.f32 %v1198, 0.0
  %v1287 = vmax.f32 %v1203, 0.0
  %v1288 = vmax.f32 %v1206, 0.0
  %v1289 = vmax.f32 %v1211, 0.0
  %v1290 = vmax.f32 %v1214, 0.0
  %v1291 = vmax.f32 %v1219, 0.0
  %v1292 = vmax.f32 %v1222, 0.0
  %v1293 = vmax.f32 %v1227, 0.0
  %v1294 = vmax.f32 %v1230, 0.0
  %v1295 = vmax.f32 %v1235, 0.0
  %v1296 = vmax.f32 %v1238, 0.0
  %v1297 = vmax.f32 %v1243, 0.0
  %v1298 = vmax.f32 %v1246, 0.0
  %v1299 = vmax.f32 %v1251, 0.0
  %v1300 = vmax.f32 %v1254, 0.0
  %v1301 = vmax.f32 %v1259, 0.0
  %v1302 = vmax.f32 %v1262, 0.0
  %v1303 = vmax.f32 %v1267, 0.0
  %v1304 = vmax.f32 %v1270, 0.0
  %v1305 = vpack.c.bf16 %v1274, %v1273
  %v1306 = vpack.c.bf16 %v1276, %v1275
  %v1307 = vpack.c.bf16 %v1278, %v1277
  %v1308 = vpack.c.bf16 %v1280, %v1279
  %v1309 = vpack.c.bf16 %v1282, %v1281
  %v1310 = vpack.c.bf16 %v1284, %v1283
  %v1311 = vpack.c.bf16 %v1286, %v1285
  %v1312 = vpack.c.bf16 %v1288, %v1287
  %v1313 = vpack.c.bf16 %v1290, %v1289
  %v1314 = vpack.c.bf16 %v1292, %v1291
  %v1315 = vpack.c.bf16 %v1294, %v1293
  %v1316 = vpack.c.bf16 %v1296, %v1295
  %v1317 = vpack.c.bf16 %v1298, %v1297
  %v1318 = vpack.c.bf16 %v1300, %v1299
  %v1319 = vpack.c.bf16 %v1302, %v1301
  %v1320 = vpack.c.bf16 %v1304, %v1303
  %v1321 = vld [vmem:[%s6] sm:$0xf]
  %v1322 = vld [vmem:[%s6 + $0x4] sm:$0xf]
  %v1323 = vld [vmem:[%s6 + $0x8] sm:$0xf]
  %v1324 = vld [vmem:[%s6 + $0xc] sm:$0xf]
  %v1325 = vld [vmem:[%s6 + $0x10] sm:$0xf]
  %v1326 = vld [vmem:[%s6 + $0x14] sm:$0xf]
  %v1327 = vld [vmem:[%s6 + $0x18] sm:$0xf]
  %v1328 = vld [vmem:[%s6 + $0x1c] sm:$0xf]
  %v1329 = vld [vmem:[%s6 + $0x20] sm:$0xf]
  %v1330 = vld [vmem:[%s6 + $0x24] sm:$0xf]
  %v1331 = vld [vmem:[%s6 + $0x28] sm:$0xf]
  %v1332 = vld [vmem:[%s6 + $0x2c] sm:$0xf]
  %v1333 = vld [vmem:[%s6 + $0x30] sm:$0xf]
  %v1334 = vld [vmem:[%s6 + $0x34] sm:$0xf]
  %v1335 = vld [vmem:[%s6 + $0x38] sm:$0xf]
  %v1336 = vld [vmem:[%s6 + $0x3c] sm:$0xf]
  %v1337 = vld [vmem:[%s6 + $0x40] sm:$0xf]
  %v1338 = vld [vmem:[%s6 + $0x44] sm:$0xf]
  %v1339 = vld [vmem:[%s6 + $0x48] sm:$0xf]
  %v1340 = vld [vmem:[%s6 + $0x4c] sm:$0xf]
  %v1341 = vld [vmem:[%s6 + $0x50] sm:$0xf]
  %v1342 = vld [vmem:[%s6 + $0x54] sm:$0xf]
  %v1343 = vld [vmem:[%s6 + $0x58] sm:$0xf]
  %v1344 = vld [vmem:[%s6 + $0x5c] sm:$0xf]
  %v1345 = vld [vmem:[%s6 + $0x60] sm:$0xf]
  %v1346 = vld [vmem:[%s6 + $0x64] sm:$0xf]
  %v1347 = vld [vmem:[%s6 + $0x68] sm:$0xf]
  %v1348 = vld [vmem:[%s6 + $0x6c] sm:$0xf]
  %v1349 = vld [vmem:[%s6 + $0x70] sm:$0xf]
  %v1350 = vld [vmem:[%s6 + $0x74] sm:$0xf]
  %v1351 = vld [vmem:[%s6 + $0x78] sm:$0xf]
  %v1352 = vld [vmem:[%s6 + $0x7c] sm:$0xf]
  %v1385 = vunpack.c.l.b16 %v1321
  %v1386 = vunpack.c.l.b16 %v1322
  %v1387 = vunpack.c.l.b16 %v1323
  %v1388 = vunpack.c.l.b16 %v1324
  %v1389 = vunpack.c.l.b16 %v1325
  %v1390 = vunpack.c.l.b16 %v1326
  %v1391 = vunpack.c.l.b16 %v1327
  %v1392 = vunpack.c.l.b16 %v1328
  %v1393 = vunpack.c.l.b16 %v1329
  %v1394 = vunpack.c.l.b16 %v1330
  %v1395 = vunpack.c.l.b16 %v1331
  %v1396 = vunpack.c.l.b16 %v1332
  %v1397 = vunpack.c.l.b16 %v1333
  %v1398 = vunpack.c.l.b16 %v1334
  %v1399 = vunpack.c.l.b16 %v1335
  %v1400 = vunpack.c.l.b16 %v1336
  %v1401 = vunpack.c.l.b16 %v1337
  %v1402 = vunpack.c.l.b16 %v1338
  %v1403 = vunpack.c.l.b16 %v1339
  %v1404 = vunpack.c.l.b16 %v1340
  %v1405 = vunpack.c.l.b16 %v1341
  %v1406 = vunpack.c.l.b16 %v1342
  %v1407 = vunpack.c.l.b16 %v1343
  %v1408 = vunpack.c.l.b16 %v1344
  %v1409 = vunpack.c.l.b16 %v1345
  %v1410 = vunpack.c.l.b16 %v1346
  %v1411 = vunpack.c.l.b16 %v1347
  %v1412 = vunpack.c.l.b16 %v1348
  %v1413 = vunpack.c.l.b16 %v1349
  %v1414 = vunpack.c.l.b16 %v1350
  %v1415 = vunpack.c.l.b16 %v1351
  %v1416 = vunpack.c.l.b16 %v1352
  %v1417 = vpack.c.b16 %v1386, %v1385
  %v1418 = vpack.c.b16 %v1388, %v1387
  %v1419 = vpack.c.b16 %v1390, %v1389
  %v1420 = vpack.c.b16 %v1392, %v1391
  %v1421 = vpack.c.b16 %v1394, %v1393
  %v1422 = vpack.c.b16 %v1396, %v1395
  %v1423 = vpack.c.b16 %v1398, %v1397
  %v1424 = vpack.c.b16 %v1400, %v1399
  %v1425 = vpack.c.b16 %v1402, %v1401
  %v1426 = vpack.c.b16 %v1404, %v1403
  %v1427 = vpack.c.b16 %v1406, %v1405
  %v1428 = vpack.c.b16 %v1408, %v1407
  %v1429 = vpack.c.b16 %v1410, %v1409
  %v1430 = vpack.c.b16 %v1412, %v1411
  %v1431 = vpack.c.b16 %v1414, %v1413
  %v1432 = vpack.c.b16 %v1416, %v1415
  %1449 = vmatprep.subr.bf16.mxu0 0
  %1450 = vmatpush1.bf16.msra.mxu0 %v1417
  %1451 = vmatprep.subr.bf16.mxu0 0
  %1452 = vmatpush1.bf16.msra.mxu0 %v1418
  %1453 = vmatprep.subr.bf16.mxu0 0
  %1454 = vmatpush1.bf16.msra.mxu0 %v1419
  %1455 = vmatprep.subr.bf16.mxu0 0
  %1456 = vmatpush1.bf16.msra.mxu0 %v1420
  %1457 = vmatprep.subr.bf16.mxu0 0
  %1458 = vmatpush1.bf16.msra.mxu0 %v1421
  %1459 = vmatprep.subr.bf16.mxu0 0
  %1460 = vmatpush1.bf16.msra.mxu0 %v1422
  %1461 = vmatprep.subr.bf16.mxu0 0
  %1462 = vmatpush1.bf16.msra.mxu0 %v1423
  %1463 = vmatprep.subr.bf16.mxu0 0
  %1464 = vmatpush1.bf16.msra.mxu0 %v1424
  %1465 = vmatprep.subr.bf16.mxu0 0
  %1466 = vmatpush1.bf16.msra.mxu0 %v1425
  %1467 = vmatprep.subr.bf16.mxu0 0
  %1468 = vmatpush1.bf16.msra.mxu0 %v1426
  %1469 = vmatprep.subr.bf16.mxu0 0
  %1470 = vmatpush1.bf16.msra.mxu0 %v1427
  %1471 = vmatprep.subr.bf16.mxu0 0
  %1472 = vmatpush1.bf16.msra.mxu0 %v1428
  %1473 = vmatprep.subr.bf16.mxu0 0
  %1474 = vmatpush1.bf16.msra.mxu0 %v1429
  %1475 = vmatprep.subr.bf16.mxu0 0
  %1476 = vmatpush1.bf16.msra.mxu0 %v1430
  %1477 = vmatprep.subr.bf16.mxu0 0
  %1478 = vmatpush1.bf16.msra.mxu0 %v1431
  %1479 = vmatprep.subr.bf16.mxu0 0
  %1480 = vmatpush1.bf16.msra.mxu0 %v1432
  %1481 = vmatprep.mubr.bf16.mxu0 %v1305
  %1482 = vmatmul.mubr.bf16.gmra.mrb[0].mxu0 %v659
  %v1483 = vpop.f32.mrb[0].mxu0
  %v1484 = vadd.f32 0.0, %v1483
  %v1485 = vpop.f32.mrb[0].mxu0
  %v1486 = vpop.f32.mrb[0].mxu0
  %v1487 = vadd.f32 0.0, %v1486
  %v1488 = vpop.f32.mrb[0].mxu0
  %1489 = vmatprep.mubr.bf16.mxu0 %v1306
  %1490 = vmatmul.mubr.bf16.gmra.mrb[0].mxu0 %v660
  %v1491 = vpop.f32.mrb[0].mxu0
  %v1492 = vadd.f32 0.0, %v1491
  %v1493 = vpop.f32.mrb[0].mxu0
  %v1494 = vpop.f32.mrb[0].mxu0
  %v1495 = vadd.f32 0.0, %v1494
  %v1496 = vpop.f32.mrb[0].mxu0
  %1497 = vmatprep.mubr.bf16.mxu0 %v1307
  %1498 = vmatmul.mubr.bf16.gmra.mrb[0].mxu0 %v661
  %v1499 = vpop.f32.mrb[0].mxu0
  %v1500 = vadd.f32 0.0, %v1499
  %v1501 = vpop.f32.mrb[0].mxu0
  %v1502 = vpop.f32.mrb[0].mxu0
  %v1503 = vadd.f32 0.0, %v1502
  %v1504 = vpop.f32.mrb[0].mxu0
  %1505 = vmatprep.mubr.bf16.mxu0 %v1308
  %1506 = vmatmul.mubr.bf16.gmra.mrb[0].mxu0 %v662
  %v1507 = vpop.f32.mrb[0].mxu0
  %v1508 = vadd.f32 0.0, %v1507
  %v1509 = vpop.f32.mrb[0].mxu0
  %v1510 = vpop.f32.mrb[0].mxu0
  %v1511 = vadd.f32 0.0, %v1510
  %v1512 = vpop.f32.mrb[0].mxu0
  %1513 = vmatprep.mubr.bf16.mxu0 %v1309
  %1514 = vmatmul.mubr.bf16.gmra.mrb[0].mxu0 %v663
  %v1515 = vpop.f32.mrb[0].mxu0
  %v1516 = vadd.f32 0.0, %v1515
  %v1517 = vpop.f32.mrb[0].mxu0
  %v1518 = vpop.f32.mrb[0].mxu0
  %v1519 = vadd.f32 0.0, %v1518
  %v1520 = vpop.f32.mrb[0].mxu0
  %1521 = vmatprep.mubr.bf16.mxu0 %v1310
  %1522 = vmatmul.mubr.bf16.gmra.mrb[0].mxu0 %v664
  %v1523 = vpop.f32.mrb[0].mxu0
  %v1524 = vadd.f32 0.0, %v1523
  %v1525 = vpop.f32.mrb[0].mxu0
  %v1526 = vpop.f32.mrb[0].mxu0
  %v1527 = vadd.f32 0.0, %v1526
  %v1528 = vpop.f32.mrb[0].mxu0
  %1529 = vmatprep.mubr.bf16.mxu0 %v1311
  %1530 = vmatmul.mubr.bf16.gmra.mrb[0].mxu0 %v665
  %v1531 = vpop.f32.mrb[0].mxu0
  %v1532 = vadd.f32 0.0, %v1531
  %v1533 = vpop.f32.mrb[0].mxu0
  %v1534 = vpop.f32.mrb[0].mxu0
  %v1535 = vadd.f32 0.0, %v1534
  %v1536 = vpop.f32.mrb[0].mxu0
  %1537 = vmatprep.mubr.bf16.mxu0 %v1312
  %1538 = vmatmul.mubr.bf16.gmra.mrb[0].mxu0 %v666
  %v1539 = vpop.f32.mrb[0].mxu0
  %v1540 = vadd.f32 0.0, %v1539
  %v1541 = vpop.f32.mrb[0].mxu0
  %v1542 = vpop.f32.mrb[0].mxu0
  %v1543 = vadd.f32 0.0, %v1542
  %v1544 = vpop.f32.mrb[0].mxu0
  %1545 = vmatprep.mubr.bf16.mxu0 %v1313
  %1546 = vmatmul.mubr.bf16.gmra.mrb[0].mxu0 %v667
  %v1547 = vpop.f32.mrb[0].mxu0
  %v1548 = vadd.f32 0.0, %v1547
  %v1549 = vpop.f32.mrb[0].mxu0
  %v1550 = vpop.f32.mrb[0].mxu0
  %v1551 = vadd.f32 0.0, %v1550
  %v1552 = vpop.f32.mrb[0].mxu0
  %1553 = vmatprep.mubr.bf16.mxu0 %v1314
  %1554 = vmatmul.mubr.bf16.gmra.mrb[0].mxu0 %v668
  %v1555 = vpop.f32.mrb[0].mxu0
  %v1556 = vadd.f32 0.0, %v1555
  %v1557 = vpop.f32.mrb[0].mxu0
  %v1558 = vpop.f32.mrb[0].mxu0
  %v1559 = vadd.f32 0.0, %v1558
  %v1560 = vpop.f32.mrb[0].mxu0
  %1561 = vmatprep.mubr.bf16.mxu0 %v1315
  %1562 = vmatmul.mubr.bf16.gmra.mrb[0].mxu0 %v669
  %v1563 = vpop.f32.mrb[0].mxu0
  %v1564 = vadd.f32 0.0, %v1563
  %v1565 = vpop.f32.mrb[0].mxu0
  %v1566 = vpop.f32.mrb[0].mxu0
  %v1567 = vadd.f32 0.0, %v1566
  %v1568 = vpop.f32.mrb[0].mxu0
  %1569 = vmatprep.mubr.bf16.mxu0 %v1316
  %1570 = vmatmul.mubr.bf16.gmra.mrb[0].mxu0 %v670
  %v1571 = vpop.f32.mrb[0].mxu0
  %v1572 = vadd.f32 0.0, %v1571
  %v1573 = vpop.f32.mrb[0].mxu0
  %v1574 = vpop.f32.mrb[0].mxu0
  %v1575 = vadd.f32 0.0, %v1574
  %v1576 = vpop.f32.mrb[0].mxu0
  %1577 = vmatprep.mubr.bf16.mxu0 %v1317
  %1578 = vmatmul.mubr.bf16.gmra.mrb[0].mxu0 %v671
  %v1579 = vpop.f32.mrb[0].mxu0
  %v1580 = vadd.f32 0.0, %v1579
  %v1581 = vpop.f32.mrb[0].mxu0
  %v1582 = vpop.f32.mrb[0].mxu0
  %v1583 = vadd.f32 0.0, %v1582
  %v1584 = vpop.f32.mrb[0].mxu0
  %1585 = vmatprep.mubr.bf16.mxu0 %v1318
  %1586 = vmatmul.mubr.bf16.gmra.mrb[0].mxu0 %v672
  %v1587 = vpop.f32.mrb[0].mxu0
  %v1588 = vadd.f32 0.0, %v1587
  %v1589 = vpop.f32.mrb[0].mxu0
  %v1590 = vpop.f32.mrb[0].mxu0
  %v1591 = vadd.f32 0.0, %v1590
  %v1592 = vpop.f32.mrb[0].mxu0
  %1593 = vmatprep.mubr.bf16.mxu0 %v1319
  %1594 = vmatmul.mubr.bf16.gmra.mrb[0].mxu0 %v673
  %v1595 = vpop.f32.mrb[0].mxu0
  %v1596 = vadd.f32 0.0, %v1595
  %v1597 = vpop.f32.mrb[0].mxu0
  %v1598 = vpop.f32.mrb[0].mxu0
  %v1599 = vadd.f32 0.0, %v1598
  %v1600 = vpop.f32.mrb[0].mxu0
  %1601 = vmatprep.mubr.bf16.mxu0 %v1320
  %1602 = vmatmul.mubr.bf16.gmra.mrb[0].mxu0 %v674
  %v1603 = vpop.f32.mrb[0].mxu0
  %v1604 = vadd.f32 0.0, %v1603
  %v1605 = vpop.f32.mrb[0].mxu0
  %v1606 = vpop.f32.mrb[0].mxu0
  %v1607 = vadd.f32 0.0, %v1606
  %v1608 = vpop.f32.mrb[0].mxu0
  %1609 = vdwg.mxu0
  %1610 = vst [vmem:[%s7] sm:$0xff] %v1484
  %1611 = vst [vmem:[%s7 + $0x8] sm:$0xff] %v1487
  %1612 = vst [vmem:[%s7 + $0x10] sm:$0xff] %v1492
  %1613 = vst [vmem:[%s7 + $0x18] sm:$0xff] %v1495
  %1614 = vst [vmem:[%s7 + $0x20] sm:$0xff] %v1500
  %1615 = vst [vmem:[%s7 + $0x28] sm:$0xff] %v1503
  %1616 = vst [vmem:[%s7 + $0x30] sm:$0xff] %v1508
  %1617 = vst [vmem:[%s7 + $0x38] sm:$0xff] %v1511
  %1618 = vst [vmem:[%s7 + $0x40] sm:$0xff] %v1516
  %1619 = vst [vmem:[%s7 + $0x48] sm:$0xff] %v1519
  %1620 = vst [vmem:[%s7 + $0x50] sm:$0xff] %v1524
  %1621 = vst [vmem:[%s7 + $0x58] sm:$0xff] %v1527
  %1622 = vst [vmem:[%s7 + $0x60] sm:$0xff] %v1532
  %1623 = vst [vmem:[%s7 + $0x68] sm:$0xff] %v1535
  %1624 = vst [vmem:[%s7 + $0x70] sm:$0xff] %v1540
  %1625 = vst [vmem:[%s7 + $0x78] sm:$0xff] %v1543
  %1626 = vst [vmem:[%s7 + $0x80] sm:$0xff] %v1548
  %1627 = vst [vmem:[%s7 + $0x88] sm:$0xff] %v1551
  %1628 = vst [vmem:[%s7 + $0x90] sm:$0xff] %v1556
  %1629 = vst [vmem:[%s7 + $0x98] sm:$0xff] %v1559
  %1630 = vst [vmem:[%s7 + $0xa0] sm:$0xff] %v1564
  %1631 = vst [vmem:[%s7 + $0xa8] sm:$0xff] %v1567
  %1632 = vst [vmem:[%s7 + $0xb0] sm:$0xff] %v1572
  %1633 = vst [vmem:[%s7 + $0xb8] sm:$0xff] %v1575
  %1634 = vst [vmem:[%s7 + $0xc0] sm:$0xff] %v1580
  %1635 = vst [vmem:[%s7 + $0xc8] sm:$0xff] %v1583
  %1636 = vst [vmem:[%s7 + $0xd0] sm:$0xff] %v1588
  %1637 = vst [vmem:[%s7 + $0xd8] sm:$0xff] %v1591
  %1638 = vst [vmem:[%s7 + $0xe0] sm:$0xff] %v1596
  %1639 = vst [vmem:[%s7 + $0xe8] sm:$0xff] %v1599
  %1640 = vst [vmem:[%s7 + $0xf0] sm:$0xff] %v1604
  %1641 = vst [vmem:[%s7 + $0xf8] sm:$0xff] %v1607
  // Predicated region
  $region30: #{eign_forward.1} parent=0 // pred_check
    _
  $region31: #{eign_forward.1} parent=0 // pred_check_branch
    %1643 = sbr.rel (0) target = $region33
  $region32: #{eign_forward.1} parent=0 // pred_region
    _
  $region33: #{eign_forward.1} parent=0 // pred_fallthru
    _
  // Predicated region
  $region34: #{eign_forward.1} parent=0 // pred_check
    _
  $region35: #{eign_forward.1} parent=0 // pred_check_branch
    %1645 = sbr.rel (0) target = $region37
  $region36: #{eign_forward.1} parent=0 // pred_region
    _
  $region37: #{eign_forward.1} parent=0 // pred_fallthru
    _

</llo_original>
